<compile_context>
chip_gen: v7x
topology: tpu7x:2x2x1
jax: 0.10.0
libtpu: 0.0.40
codegen_flags: <defaults>
</compile_context>

<pallas_src>
import functools

import jax
import jax.numpy as jnp
from jax.experimental import pallas as pl
from jax.experimental.pallas import tpu as pltpu


def _round_up(x, m):
    return (x + m - 1) // m * m


def _pad2d(a, rows, cols):
    r, c = a.shape
    return jnp.pad(a.astype(jnp.float32), ((0, rows - r), (0, cols - c)))


def _pad_row(b, cols):
    return jnp.pad(b.astype(jnp.float32), ((0, cols - b.shape[0]),)).reshape(1, cols)


# ----------------------------------------------------------------------------
# Pallas kernels
# ----------------------------------------------------------------------------
def _conv_relu_pool_kernel(x_ref, w_ref, b_ref, o_ref):
    # x_ref: (4, tm, Kp) — im2col patches, one slab per 2x2 pooling-window tap.
    # Fused epilogue: max over the 4 taps (pool) -> +bias -> ReLU.
    w = w_ref[...]
    acc = jnp.dot(x_ref[0], w, preferred_element_type=jnp.float32)
    for t in range(1, 4):
        acc = jnp.maximum(acc, jnp.dot(x_ref[t], w, preferred_element_type=jnp.float32))
    o_ref[...] = jnp.maximum(acc + b_ref[...], 0.0)


def _fc_stack_kernel(x_ref, w1_ref, b1_ref, w2_ref, b2_ref, w3_ref, b3_ref, o_ref):
    # fc1 -> ReLU -> fc2 -> ReLU -> out, intermediates stay in vregs/VMEM.
    h = jnp.dot(x_ref[...], w1_ref[...], preferred_element_type=jnp.float32) + b1_ref[...]
    h = jnp.maximum(h, 0.0)
    h = jnp.dot(h, w2_ref[...], preferred_element_type=jnp.float32) + b2_ref[...]
    h = jnp.maximum(h, 0.0)
    o_ref[...] = jnp.dot(h, w3_ref[...], preferred_element_type=jnp.float32) + b3_ref[...]


# ----------------------------------------------------------------------------
# Layer wrappers
# ----------------------------------------------------------------------------
def conv2d_relu_pool(x_nhwc, w_pad, b_pad, *, kh, kw, oc, tm_max=512):
    """valid conv (stride 1) + bias + ReLU + 2x2/2 max-pool, fused in one kernel.

    x_nhwc: (N, H, W, C) f32.  w_pad: (Kp, 128) pre-padded flattened weight
    (columns of the un-padded part ordered (c, dy, dx) to match PyTorch).
    Returns (N, OH//2, OW//2, oc) NHWC.
    """
    N, H, W, C = x_nhwc.shape
    OH, OW = H - kh + 1, W - kw + 1
    POH, POW = OH // 2, OW // 2
    K = C * kh * kw
    Kp, OCp = w_pad.shape

    # im2col (XLA glue): (N, OH, OW, K), columns ordered (c, dy, dx).
    taps = [x_nhwc[:, dy:dy + OH, dx:dx + OW, :] for dy in range(kh) for dx in range(kw)]
    patches = jnp.stack(taps, axis=-1).reshape(N, OH, OW, K)
    # Partition rows by 2x2 pooling-window tap: (4, N*POH*POW, K); rows are (n, py, px).
    patches = patches.reshape(N, POH, 2, POW, 2, K).transpose(2, 4, 0, 1, 3, 5)
    M = N * POH * POW
    patches = patches.reshape(4, M, K)

    tm = min(tm_max, _round_up(M, 8))
    Mp = _round_up(M, tm)
    patches = jnp.pad(patches.astype(jnp.float32), ((0, 0), (0, Mp - M), (0, Kp - K)))

    out = pl.pallas_call(
        _conv_relu_pool_kernel,
        out_shape=jax.ShapeDtypeStruct((Mp, OCp), jnp.float32),
        grid=(Mp // tm,),
        in_specs=[
            pl.BlockSpec((4, tm, Kp), lambda i: (0, i, 0)),
            pl.BlockSpec((Kp, OCp), lambda i: (0, 0)),
            pl.BlockSpec((1, OCp), lambda i: (0, 0)),
        ],
        out_specs=pl.BlockSpec((tm, OCp), lambda i: (i, 0)),
        compiler_params=pltpu.CompilerParams(dimension_semantics=("parallel",)),
    )(patches, w_pad, b_pad)
    return out[:M, :oc].reshape(N, POH, POW, oc)


def fc_stack(x, w1, b1, w2, b2, w3, b3, *, out_features, tm_max=256):
    """y = (relu(relu(x@w1+b1)@w2+b2))@w3+b3 in a single Pallas kernel."""
    M, K = x.shape
    K1p = w1.shape[0]
    N3p = w3.shape[1]
    tm = min(tm_max, _round_up(M, 8))
    Mp = _round_up(M, tm)
    xp = jnp.pad(x.astype(jnp.float32), ((0, Mp - M), (0, K1p - K)))

    out = pl.pallas_call(
        _fc_stack_kernel,
        out_shape=jax.ShapeDtypeStruct((Mp, N3p), jnp.float32),
        grid=(Mp // tm,),
        in_specs=[
            pl.BlockSpec((tm, K1p), lambda i: (i, 0)),
            pl.BlockSpec(w1.shape, lambda i: (0, 0)),
            pl.BlockSpec(b1.shape, lambda i: (0, 0)),
            pl.BlockSpec(w2.shape, lambda i: (0, 0)),
            pl.BlockSpec(b2.shape, lambda i: (0, 0)),
            pl.BlockSpec(w3.shape, lambda i: (0, 0)),
            pl.BlockSpec(b3.shape, lambda i: (0, 0)),
        ],
        out_specs=pl.BlockSpec((tm, N3p), lambda i: (i, 0)),
        compiler_params=pltpu.CompilerParams(dimension_semantics=("parallel",)),
    )(xp, w1, b1, w2, b2, w3, b3)
    return out[:M, :out_features]


# ----------------------------------------------------------------------------
# Parameters (deterministic, PyTorch-style U(-1/sqrt(fan_in), 1/sqrt(fan_in)))
# ----------------------------------------------------------------------------
def init_params(key):
    def uniform(k, shape, fan_in):
        bound = 1.0 / jnp.sqrt(jnp.float32(fan_in))
        return jax.random.uniform(k, shape, jnp.float32, -bound, bound)

    ks = jax.random.split(key, 10)
    return {
        "conv1_w": uniform(ks[0], (6, 1, 5, 5), 1 * 5 * 5),
        "conv1_b": uniform(ks[1], (6,), 1 * 5 * 5),
        "conv2_w": uniform(ks[2], (12, 6, 5, 5), 6 * 5 * 5),
        "conv2_b": uniform(ks[3], (12,), 6 * 5 * 5),
        "fc1_w": uniform(ks[4], (120, 192), 192),
        "fc1_b": uniform(ks[5], (120,), 192),
        "fc2_w": uniform(ks[6], (60, 120), 120),
        "fc2_b": uniform(ks[7], (60,), 120),
        "out_w": uniform(ks[8], (10, 60), 60),
        "out_b": uniform(ks[9], (10,), 60),
    }


def prepare_params(params):
    """One-time repack (outside jit): flatten, transpose and zero-pad weights to
    lane-dense (Kp, 128) MXU layouts; biases to (1, 128)."""
    c1w = params["conv1_w"].reshape(6, 1 * 5 * 5).T          # (25, 6)
    c2w = params["conv2_w"].reshape(12, 6 * 5 * 5).T         # (150, 12)
    # fc1 columns are (c, y, x) in the PyTorch flatten; permute to (y, x, c) so the
    # NHWC conv2 output flattens straight into fc1 with no transpose in the forward.
    f1w = (params["fc1_w"].reshape(120, 12, 4, 4)
           .transpose(0, 2, 3, 1).reshape(120, 192).T)       # (192, 120)
    f2w = params["fc2_w"].T                                   # (120, 60)
    f3w = params["out_w"].T                                   # (60, 10)
    return {
        "c1_w": _pad2d(c1w, 128, 128), "c1_b": _pad_row(params["conv1_b"], 128),
        "c2_w": _pad2d(c2w, 256, 128), "c2_b": _pad_row(params["conv2_b"], 128),
        "f1_w": _pad2d(f1w, 256, 128), "f1_b": _pad_row(params["fc1_b"], 128),
        "f2_w": _pad2d(f2w, 128, 128), "f2_b": _pad_row(params["fc2_b"], 128),
        "f3_w": _pad2d(f3w, 128, 128), "f3_b": _pad_row(params["out_b"], 128),
    }


# ----------------------------------------------------------------------------
# Forward pass (mirrors Network.forward)
# ----------------------------------------------------------------------------
def network_forward(pp, t):
    # t: (N, 1, 28, 28) float32, NCHW at the module boundary (PyTorch convention).
    N = t.shape[0]
    h = t.transpose(0, 2, 3, 1).astype(jnp.float32)                       # NHWC, C=1
    h = conv2d_relu_pool(h, pp["c1_w"], pp["c1_b"], kh=5, kw=5, oc=6)     # (N, 12, 12, 6)
    h = conv2d_relu_pool(h, pp["c2_w"], pp["c2_b"], kh=5, kw=5, oc=12)    # (N, 4, 4, 12)
    h = h.reshape(N, 12 * 4 * 4)            # NHWC flatten (y, x, c); fc1 pre-permuted
    return fc_stack(h, pp["f1_w"], pp["f1_b"], pp["f2_w"], pp["f2_b"],
                    pp["f3_w"], pp["f3_b"], out_features=10)              # (N, 10)


# ----------------------------------------------------------------------------
# Pure-JAX reference (for a structural sanity check)
# ----------------------------------------------------------------------------
def _reference_forward(params, t):
    hi = jax.lax.Precision.HIGHEST
    dn = ("NCHW", "OIHW", "NCHW")
    h = jax.lax.conv_general_dilated(t, params["conv1_w"], (1, 1), "VALID",
                                     dimension_numbers=dn, precision=hi)
    h = jnp.maximum(h + params["conv1_b"][None, :, None, None], 0.0)
    h = jax.lax.reduce_window(h, -jnp.inf, jax.lax.max, (1, 1, 2, 2), (1, 1, 2, 2), "VALID")
    h = jax.lax.conv_general_dilated(h, params["conv2_w"], (1, 1), "VALID",
                                     dimension_numbers=dn, precision=hi)
    h = jnp.maximum(h + params["conv2_b"][None, :, None, None], 0.0)
    h = jax.lax.reduce_window(h, -jnp.inf, jax.lax.max, (1, 1, 2, 2), (1, 1, 2, 2), "VALID")
    h = h.reshape(h.shape[0], -1)
    h = jnp.maximum(jnp.dot(h, params["fc1_w"].T, precision=hi) + params["fc1_b"], 0.0)
    h = jnp.maximum(jnp.dot(h, params["fc2_w"].T, precision=hi) + params["fc2_b"], 0.0)
    return jnp.dot(h, params["out_w"].T, precision=hi) + params["out_b"]


if __name__ == "__main__":
    key = jax.random.PRNGKey(0)
    k_params, k_x = jax.random.split(key)
    params = init_params(k_params)
    prepped = prepare_params(params)   # one-time repack, outside the jitted forward

    # Input shape implied by the module: 1 channel, 28x28 (so the flatten is 12*4*4).
    x = jax.random.normal(k_x, (2, 1, 28, 28), dtype=jnp.float32)

    out = jax.jit(network_forward)(prepped, x)
    out = jax.block_until_ready(out)

    assert out.shape == (2, 10), out.shape
    assert out.dtype == jnp.float32, out.dtype

    ref = _reference_forward(params, x)
    assert jnp.allclose(out, ref, rtol=2e-2, atol=2e-2), (out, ref)

    print("KERNEL_OK")
</pallas_src>

<mosaic_0001>
module attributes {stable_mosaic.version = 11 : i64} {
  func.func @_conv_relu_pool_kernel(%arg0: i32, %arg1: memref<4x288x128xf32, #tpu.memory_space<vmem>>, %arg2: memref<128x128xf32, #tpu.memory_space<vmem>>, %arg3: memref<1x128xf32, #tpu.memory_space<vmem>>, %arg4: memref<288x128xf32, #tpu.memory_space<vmem>>) attributes {dimension_semantics = [#tpu.dimension_semantics<parallel>], iteration_bounds = array<i64: 1>, scalar_prefetch = 0 : i64, scratch_operands = 0 : i64, tpu.core_type = #tpu.core_type<tc>, window_params = [{transform_indices = @transform_0, window_bounds = array<i64: 4, 288, 128>}, {pipeline_mode = #tpu.pipeline_mode<synchronous>, transform_indices = @transform_1, window_bounds = array<i64: 128, 128>}, {pipeline_mode = #tpu.pipeline_mode<synchronous>, transform_indices = @transform_2, window_bounds = array<i64: 1, 128>}, {transform_indices = @transform_3, window_bounds = array<i64: 288, 128>}]} {
    %c0 = arith.constant 0 : index
    %c0_0 = arith.constant 0 : index
    %0 = vector.load %arg2[%c0, %c0_0] : memref<128x128xf32, #tpu.memory_space<vmem>>, vector<128x128xf32>
    %c0_1 = arith.constant 0 : index
    %c0_2 = arith.constant 0 : index
    %c0_3 = arith.constant 0 : index
    %1 = vector.load %arg1[%c0_1, %c0_2, %c0_3] : memref<4x288x128xf32, #tpu.memory_space<vmem>>, vector<1x288x128xf32>
    %2 = vector.shape_cast %1 : vector<1x288x128xf32> to vector<288x128xf32>
    %cst = arith.constant dense<0.000000e+00> : vector<288x128xf32>
    %3 = tpu.matmul %2, %0, %cst {dimension_numbers = #tpu.dot_dimension_numbers<[1], [0], [0], [1], [0, 0, 1, 1], [], []>} : vector<288x128xf32>, vector<128x128xf32>, vector<288x128xf32> -> vector<288x128xf32>
    %c1 = arith.constant 1 : index
    %c0_4 = arith.constant 0 : index
    %c0_5 = arith.constant 0 : index
    %4 = vector.load %arg1[%c1, %c0_4, %c0_5] : memref<4x288x128xf32, #tpu.memory_space<vmem>>, vector<1x288x128xf32>
    %5 = vector.shape_cast %4 : vector<1x288x128xf32> to vector<288x128xf32>
    %cst_6 = arith.constant dense<0.000000e+00> : vector<288x128xf32>
    %6 = tpu.matmul %5, %0, %cst_6 {dimension_numbers = #tpu.dot_dimension_numbers<[1], [0], [0], [1], [0, 0, 1, 1], [], []>} : vector<288x128xf32>, vector<128x128xf32>, vector<288x128xf32> -> vector<288x128xf32>
    %7 = arith.maximumf %3, %6 : vector<288x128xf32>
    %c2 = arith.constant 2 : index
    %c0_7 = arith.constant 0 : index
    %c0_8 = arith.constant 0 : index
    %8 = vector.load %arg1[%c2, %c0_7, %c0_8] : memref<4x288x128xf32, #tpu.memory_space<vmem>>, vector<1x288x128xf32>
    %9 = vector.shape_cast %8 : vector<1x288x128xf32> to vector<288x128xf32>
    %cst_9 = arith.constant dense<0.000000e+00> : vector<288x128xf32>
    %10 = tpu.matmul %9, %0, %cst_9 {dimension_numbers = #tpu.dot_dimension_numbers<[1], [0], [0], [1], [0, 0, 1, 1], [], []>} : vector<288x128xf32>, vector<128x128xf32>, vector<288x128xf32> -> vector<288x128xf32>
    %11 = arith.maximumf %7, %10 : vector<288x128xf32>
    %c3 = arith.constant 3 : index
    %c0_10 = arith.constant 0 : index
    %c0_11 = arith.constant 0 : index
    %12 = vector.load %arg1[%c3, %c0_10, %c0_11] : memref<4x288x128xf32, #tpu.memory_space<vmem>>, vector<1x288x128xf32>
    %13 = vector.shape_cast %12 : vector<1x288x128xf32> to vector<288x128xf32>
    %cst_12 = arith.constant dense<0.000000e+00> : vector<288x128xf32>
    %14 = tpu.matmul %13, %0, %cst_12 {dimension_numbers = #tpu.dot_dimension_numbers<[1], [0], [0], [1], [0, 0, 1, 1], [], []>} : vector<288x128xf32>, vector<128x128xf32>, vector<288x128xf32> -> vector<288x128xf32>
    %15 = arith.maximumf %11, %14 : vector<288x128xf32>
    %c0_13 = arith.constant 0 : index
    %c0_14 = arith.constant 0 : index
    %16 = vector.load %arg3[%c0_13, %c0_14] : memref<1x128xf32, #tpu.memory_space<vmem>>, vector<1x128xf32>
    %17 = vector.broadcast %16 : vector<1x128xf32> to vector<288x128xf32>
    %18 = arith.addf %15, %17 : vector<288x128xf32>
    %cst_15 = arith.constant 0.000000e+00 : f32
    %19 = vector.broadcast %cst_15 : f32 to vector<288x128xf32>
    %20 = arith.maximumf %18, %19 : vector<288x128xf32>
    %c0_16 = arith.constant 0 : index
    %c0_17 = arith.constant 0 : index
    %21 = vector.load %arg4[%c0_16, %c0_17] : memref<288x128xf32, #tpu.memory_space<vmem>>, vector<288x128xf32>
    tpu.vector_store %arg4[%c0_16, %c0_17], %20 {strides = array<i32>} : memref<288x128xf32, #tpu.memory_space<vmem>>, vector<288x128xf32>,
    return
  }
  func.func @transform_0(%arg0: i32) -> (i32, i32, i32) {
    %c0_i32 = arith.constant 0 : i32
    %c0_i32_0 = arith.constant 0 : i32
    %c0_i32_1 = arith.constant 0 : i32
    return %c0_i32, %arg0, %c0_i32_0 : i32, i32, i32
  }
  func.func @transform_1(%arg0: i32) -> (i32, i32) {
    %c0_i32 = arith.constant 0 : i32
    %c0_i32_0 = arith.constant 0 : i32
    %c0_i32_1 = arith.constant 0 : i32
    return %c0_i32, %c0_i32_0 : i32, i32
  }
  func.func @transform_2(%arg0: i32) -> (i32, i32) {
    %c0_i32 = arith.constant 0 : i32
    %c0_i32_0 = arith.constant 0 : i32
    %c0_i32_1 = arith.constant 0 : i32
    return %c0_i32, %c0_i32_0 : i32, i32
  }
  func.func @transform_3(%arg0: i32) -> (i32, i32) {
    %c0_i32 = arith.constant 0 : i32
    %c0_i32_0 = arith.constant 0 : i32
    return %arg0, %c0_i32 : i32, i32
  }
}

module attributes {stable_mosaic.version = 11 : i64} {
  func.func @_conv_relu_pool_kernel(%arg0: i32, %arg1: memref<4x32x256xf32, #tpu.memory_space<vmem>>, %arg2: memref<256x128xf32, #tpu.memory_space<vmem>>, %arg3: memref<1x128xf32, #tpu.memory_space<vmem>>, %arg4: memref<32x128xf32, #tpu.memory_space<vmem>>) attributes {dimension_semantics = [#tpu.dimension_semantics<parallel>], iteration_bounds = array<i64: 1>, scalar_prefetch = 0 : i64, scratch_operands = 0 : i64, tpu.core_type = #tpu.core_type<tc>, window_params = [{transform_indices = @transform_0, window_bounds = array<i64: 4, 32, 256>}, {pipeline_mode = #tpu.pipeline_mode<synchronous>, transform_indices = @transform_1, window_bounds = array<i64: 256, 128>}, {pipeline_mode = #tpu.pipeline_mode<synchronous>, transform_indices = @transform_2, window_bounds = array<i64: 1, 128>}, {transform_indices = @transform_3, window_bounds = array<i64: 32, 128>}]} {
    %c0 = arith.constant 0 : index
    %c0_0 = arith.constant 0 : index
    %0 = vector.load %arg2[%c0, %c0_0] : memref<256x128xf32, #tpu.memory_space<vmem>>, vector<256x128xf32>
    %c0_1 = arith.constant 0 : index
    %c0_2 = arith.constant 0 : index
    %c0_3 = arith.constant 0 : index
    %1 = vector.load %arg1[%c0_1, %c0_2, %c0_3] : memref<4x32x256xf32, #tpu.memory_space<vmem>>, vector<1x32x256xf32>
    %2 = vector.shape_cast %1 : vector<1x32x256xf32> to vector<32x256xf32>
    %cst = arith.constant dense<0.000000e+00> : vector<32x128xf32>
    %3 = tpu.matmul %2, %0, %cst {dimension_numbers = #tpu.dot_dimension_numbers<[1], [0], [0], [1], [0, 0, 1, 1], [], []>} : vector<32x256xf32>, vector<256x128xf32>, vector<32x128xf32> -> vector<32x128xf32>
    %c1 = arith.constant 1 : index
    %c0_4 = arith.constant 0 : index
    %c0_5 = arith.constant 0 : index
    %4 = vector.load %arg1[%c1, %c0_4, %c0_5] : memref<4x32x256xf32, #tpu.memory_space<vmem>>, vector<1x32x256xf32>
    %5 = vector.shape_cast %4 : vector<1x32x256xf32> to vector<32x256xf32>
    %cst_6 = arith.constant dense<0.000000e+00> : vector<32x128xf32>
    %6 = tpu.matmul %5, %0, %cst_6 {dimension_numbers = #tpu.dot_dimension_numbers<[1], [0], [0], [1], [0, 0, 1, 1], [], []>} : vector<32x256xf32>, vector<256x128xf32>, vector<32x128xf32> -> vector<32x128xf32>
    %7 = arith.maximumf %3, %6 : vector<32x128xf32>
    %c2 = arith.constant 2 : index
    %c0_7 = arith.constant 0 : index
    %c0_8 = arith.constant 0 : index
    %8 = vector.load %arg1[%c2, %c0_7, %c0_8] : memref<4x32x256xf32, #tpu.memory_space<vmem>>, vector<1x32x256xf32>
    %9 = vector.shape_cast %8 : vector<1x32x256xf32> to vector<32x256xf32>
    %cst_9 = arith.constant dense<0.000000e+00> : vector<32x128xf32>
    %10 = tpu.matmul %9, %0, %cst_9 {dimension_numbers = #tpu.dot_dimension_numbers<[1], [0], [0], [1], [0, 0, 1, 1], [], []>} : vector<32x256xf32>, vector<256x128xf32>, vector<32x128xf32> -> vector<32x128xf32>
    %11 = arith.maximumf %7, %10 : vector<32x128xf32>
    %c3 = arith.constant 3 : index
    %c0_10 = arith.constant 0 : index
    %c0_11 = arith.constant 0 : index
    %12 = vector.load %arg1[%c3, %c0_10, %c0_11] : memref<4x32x256xf32, #tpu.memory_space<vmem>>, vector<1x32x256xf32>
    %13 = vector.shape_cast %12 : vector<1x32x256xf32> to vector<32x256xf32>
    %cst_12 = arith.constant dense<0.000000e+00> : vector<32x128xf32>
    %14 = tpu.matmul %13, %0, %cst_12 {dimension_numbers = #tpu.dot_dimension_numbers<[1], [0], [0], [1], [0, 0, 1, 1], [], []>} : vector<32x256xf32>, vector<256x128xf32>, vector<32x128xf32> -> vector<32x128xf32>
    %15 = arith.maximumf %11, %14 : vector<32x128xf32>
    %c0_13 = arith.constant 0 : index
    %c0_14 = arith.constant 0 : index
    %16 = vector.load %arg3[%c0_13, %c0_14] : memref<1x128xf32, #tpu.memory_space<vmem>>, vector<1x128xf32>
    %17 = vector.broadcast %16 : vector<1x128xf32> to vector<32x128xf32>
    %18 = arith.addf %15, %17 : vector<32x128xf32>
    %cst_15 = arith.constant 0.000000e+00 : f32
    %19 = vector.broadcast %cst_15 : f32 to vector<32x128xf32>
    %20 = arith.maximumf %18, %19 : vector<32x128xf32>
    %c0_16 = arith.constant 0 : index
    %c0_17 = arith.constant 0 : index
    %21 = vector.load %arg4[%c0_16, %c0_17] : memref<32x128xf32, #tpu.memory_space<vmem>>, vector<32x128xf32>
    tpu.vector_store %arg4[%c0_16, %c0_17], %20 {strides = array<i32>} : memref<32x128xf32, #tpu.memory_space<vmem>>, vector<32x128xf32>,
    return
  }
  func.func @transform_0(%arg0: i32) -> (i32, i32, i32) {
    %c0_i32 = arith.constant 0 : i32
    %c0_i32_0 = arith.constant 0 : i32
    %c0_i32_1 = arith.constant 0 : i32
    return %c0_i32, %arg0, %c0_i32_0 : i32, i32, i32
  }
  func.func @transform_1(%arg0: i32) -> (i32, i32) {
    %c0_i32 = arith.constant 0 : i32
    %c0_i32_0 = arith.constant 0 : i32
    %c0_i32_1 = arith.constant 0 : i32
    return %c0_i32, %c0_i32_0 : i32, i32
  }
  func.func @transform_2(%arg0: i32) -> (i32, i32) {
    %c0_i32 = arith.constant 0 : i32
    %c0_i32_0 = arith.constant 0 : i32
    %c0_i32_1 = arith.constant 0 : i32
    return %c0_i32, %c0_i32_0 : i32, i32
  }
  func.func @transform_3(%arg0: i32) -> (i32, i32) {
    %c0_i32 = arith.constant 0 : i32
    %c0_i32_0 = arith.constant 0 : i32
    return %arg0, %c0_i32 : i32, i32
  }
}

module attributes {stable_mosaic.version = 11 : i64} {
  func.func @_fc_stack_kernel(%arg0: i32, %arg1: memref<8x256xf32, #tpu.memory_space<vmem>>, %arg2: memref<256x128xf32, #tpu.memory_space<vmem>>, %arg3: memref<1x128xf32, #tpu.memory_space<vmem>>, %arg4: memref<128x128xf32, #tpu.memory_space<vmem>>, %arg5: memref<1x128xf32, #tpu.memory_space<vmem>>, %arg6: memref<128x128xf32, #tpu.memory_space<vmem>>, %arg7: memref<1x128xf32, #tpu.memory_space<vmem>>, %arg8: memref<8x128xf32, #tpu.memory_space<vmem>>) attributes {dimension_semantics = [#tpu.dimension_semantics<parallel>], iteration_bounds = array<i64: 1>, scalar_prefetch = 0 : i64, scratch_operands = 0 : i64, tpu.core_type = #tpu.core_type<tc>, window_params = [{transform_indices = @transform_0, window_bounds = array<i64: 8, 256>}, {pipeline_mode = #tpu.pipeline_mode<synchronous>, transform_indices = @transform_1, window_bounds = array<i64: 256, 128>}, {pipeline_mode = #tpu.pipeline_mode<synchronous>, transform_indices = @transform_2, window_bounds = array<i64: 1, 128>}, {pipeline_mode = #tpu.pipeline_mode<synchronous>, transform_indices = @transform_3, window_bounds = array<i64: 128, 128>}, {pipeline_mode = #tpu.pipeline_mode<synchronous>, transform_indices = @transform_4, window_bounds = array<i64: 1, 128>}, {pipeline_mode = #tpu.pipeline_mode<synchronous>, transform_indices = @transform_5, window_bounds = array<i64: 128, 128>}, {pipeline_mode = #tpu.pipeline_mode<synchronous>, transform_indices = @transform_6, window_bounds = array<i64: 1, 128>}, {transform_indices = @transform_7, window_bounds = array<i64: 8, 128>}]} {
    %c0 = arith.constant 0 : index
    %c0_0 = arith.constant 0 : index
    %0 = vector.load %arg1[%c0, %c0_0] : memref<8x256xf32, #tpu.memory_space<vmem>>, vector<8x256xf32>
    %c0_1 = arith.constant 0 : index
    %c0_2 = arith.constant 0 : index
    %1 = vector.load %arg2[%c0_1, %c0_2] : memref<256x128xf32, #tpu.memory_space<vmem>>, vector<256x128xf32>
    %cst = arith.constant dense<0.000000e+00> : vector<8x128xf32>
    %2 = tpu.matmul %0, %1, %cst {dimension_numbers = #tpu.dot_dimension_numbers<[1], [0], [0], [1], [0, 0, 1, 1], [], []>} : vector<8x256xf32>, vector<256x128xf32>, vector<8x128xf32> -> vector<8x128xf32>
    %c0_3 = arith.constant 0 : index
    %c0_4 = arith.constant 0 : index
    %3 = vector.load %arg3[%c0_3, %c0_4] : memref<1x128xf32, #tpu.memory_space<vmem>>, vector<1x128xf32>
    %4 = vector.broadcast %3 : vector<1x128xf32> to vector<8x128xf32>
    %5 = arith.addf %2, %4 : vector<8x128xf32>
    %cst_5 = arith.constant 0.000000e+00 : f32
    %6 = vector.broadcast %cst_5 : f32 to vector<8x128xf32>
    %7 = arith.maximumf %5, %6 : vector<8x128xf32>
    %c0_6 = arith.constant 0 : index
    %c0_7 = arith.constant 0 : index
    %8 = vector.load %arg4[%c0_6, %c0_7] : memref<128x128xf32, #tpu.memory_space<vmem>>, vector<128x128xf32>
    %cst_8 = arith.constant dense<0.000000e+00> : vector<8x128xf32>
    %9 = tpu.matmul %7, %8, %cst_8 {dimension_numbers = #tpu.dot_dimension_numbers<[1], [0], [0], [1], [0, 0, 1, 1], [], []>} : vector<8x128xf32>, vector<128x128xf32>, vector<8x128xf32> -> vector<8x128xf32>
    %c0_9 = arith.constant 0 : index
    %c0_10 = arith.constant 0 : index
    %10 = vector.load %arg5[%c0_9, %c0_10] : memref<1x128xf32, #tpu.memory_space<vmem>>, vector<1x128xf32>
    %11 = vector.broadcast %10 : vector<1x128xf32> to vector<8x128xf32>
    %12 = arith.addf %9, %11 : vector<8x128xf32>
    %cst_11 = arith.constant 0.000000e+00 : f32
    %13 = vector.broadcast %cst_11 : f32 to vector<8x128xf32>
    %14 = arith.maximumf %12, %13 : vector<8x128xf32>
    %c0_12 = arith.constant 0 : index
    %c0_13 = arith.constant 0 : index
    %15 = vector.load %arg6[%c0_12, %c0_13] : memref<128x128xf32, #tpu.memory_space<vmem>>, vector<128x128xf32>
    %cst_14 = arith.constant dense<0.000000e+00> : vector<8x128xf32>
    %16 = tpu.matmul %14, %15, %cst_14 {dimension_numbers = #tpu.dot_dimension_numbers<[1], [0], [0], [1], [0, 0, 1, 1], [], []>} : vector<8x128xf32>, vector<128x128xf32>, vector<8x128xf32> -> vector<8x128xf32>
    %c0_15 = arith.constant 0 : index
    %c0_16 = arith.constant 0 : index
    %17 = vector.load %arg7[%c0_15, %c0_16] : memref<1x128xf32, #tpu.memory_space<vmem>>, vector<1x128xf32>
    %18 = vector.broadcast %17 : vector<1x128xf32> to vector<8x128xf32>
    %19 = arith.addf %16, %18 : vector<8x128xf32>
    %c0_17 = arith.constant 0 : index
    %c0_18 = arith.constant 0 : index
    %20 = vector.load %arg8[%c0_17, %c0_18] : memref<8x128xf32, #tpu.memory_space<vmem>>, vector<8x128xf32>
    tpu.vector_store %arg8[%c0_17, %c0_18], %19 {strides = array<i32>} : memref<8x128xf32, #tpu.memory_space<vmem>>, vector<8x128xf32>,
    return
  }
  func.func @transform_0(%arg0: i32) -> (i32, i32) {
    %c0_i32 = arith.constant 0 : i32
    %c0_i32_0 = arith.constant 0 : i32
    return %arg0, %c0_i32 : i32, i32
  }
  func.func @transform_1(%arg0: i32) -> (i32, i32) {
    %c0_i32 = arith.constant 0 : i32
    %c0_i32_0 = arith.constant 0 : i32
    %c0_i32_1 = arith.constant 0 : i32
    return %c0_i32, %c0_i32_0 : i32, i32
  }
  func.func @transform_2(%arg0: i32) -> (i32, i32) {
    %c0_i32 = arith.constant 0 : i32
    %c0_i32_0 = arith.constant 0 : i32
    %c0_i32_1 = arith.constant 0 : i32
    return %c0_i32, %c0_i32_0 : i32, i32
  }
  func.func @transform_3(%arg0: i32) -> (i32, i32) {
    %c0_i32 = arith.constant 0 : i32
    %c0_i32_0 = arith.constant 0 : i32
    %c0_i32_1 = arith.constant 0 : i32
    return %c0_i32, %c0_i32_0 : i32, i32
  }
  func.func @transform_4(%arg0: i32) -> (i32, i32) {
    %c0_i32 = arith.constant 0 : i32
    %c0_i32_0 = arith.constant 0 : i32
    %c0_i32_1 = arith.constant 0 : i32
    return %c0_i32, %c0_i32_0 : i32, i32
  }
  func.func @transform_5(%arg0: i32) -> (i32, i32) {
    %c0_i32 = arith.constant 0 : i32
    %c0_i32_0 = arith.constant 0 : i32
    %c0_i32_1 = arith.constant 0 : i32
    return %c0_i32, %c0_i32_0 : i32, i32
  }
  func.func @transform_6(%arg0: i32) -> (i32, i32) {
    %c0_i32 = arith.constant 0 : i32
    %c0_i32_0 = arith.constant 0 : i32
    %c0_i32_1 = arith.constant 0 : i32
    return %c0_i32, %c0_i32_0 : i32, i32
  }
  func.func @transform_7(%arg0: i32) -> (i32, i32) {
    %c0_i32 = arith.constant 0 : i32
    %c0_i32_0 = arith.constant 0 : i32
    return %arg0, %c0_i32 : i32, i32
  }
}

</mosaic_0001>

<llo_original>
// kernel: network_forward.3
$region0: #{network_forward.3}
  #allocation0 [shape = 'u32[]', space=smem, size = 0x4, offset = 0x4, fixed_abs, tag = 'smem constant byte address 0x4 - core index']
  #allocation1 [shape = 'u32[144,128]{1,0:T(1,128)}', space=vmem, size = 0x12000, scoped, tag = 'internal scratch']
  %s0 = inlined_call_operand.vmem [shape: f32[4,288,128], index: 0, kind: input, shape index: {}]
  %s1 = inlined_call_operand.vmem [shape: f32[128,128], index: 1, kind: input, shape index: {}]
  %s2 = inlined_call_operand.vmem [shape: f32[1,128], index: 2, kind: input, shape index: {}]
  %s3 = inlined_call_operand.vmem [shape: f32[288,128], index: 3, kind: output, shape index: {}]
  %s4 = sld [smem:[#allocation0]]
  $region22: #{network_forward.3} parent=0
    _
  %s6 = ssub.s32 1, %s4
  %s7 = scalar_select 0, %s6, %s4
  // Predicated region
  $region2: #{network_forward.3} parent=0 // pred_check
    _
  $region3: #{network_forward.3} parent=0 // pred_check_branch
    %9 = sbr.rel (0) target = $region5
  $region4: #{network_forward.3} parent=0 // pred_region
    _
  $region5: #{network_forward.3} parent=0 // pred_fallthru
    _
  // Predicated region
  $region6: #{network_forward.3} parent=0 // pred_check
    _
  $region7: #{network_forward.3} parent=0 // pred_check_branch
    %11 = sbr.rel (0) target = $region9
  $region8: #{network_forward.3} parent=0 // pred_region
    _
  $region9: #{network_forward.3} parent=0 // pred_fallthru
    _
  // Predicated region
  $region10: #{network_forward.3} parent=0 // pred_check
    _
  $region11: #{network_forward.3} parent=0 // pred_check_branch
    %13 = sbr.rel (0) target = $region13
  $region12: #{network_forward.3} parent=0 // pred_region
    _
  $region13: #{network_forward.3} parent=0 // pred_fallthru
    _
  %v14 = vld [vmem:[%s1] sm:$0xff]
  %v15 = vld [vmem:[%s1 + $0x8] sm:$0xff]
  %v16 = vld [vmem:[%s1 + $0x10] sm:$0xff]
  %v17 = vld [vmem:[%s1 + $0x18] sm:$0xff]
  %v18 = vld [vmem:[%s1 + $0x20] sm:$0xff]
  %v19 = vld [vmem:[%s1 + $0x28] sm:$0xff]
  %v20 = vld [vmem:[%s1 + $0x30] sm:$0xff]
  %v21 = vld [vmem:[%s1 + $0x38] sm:$0xff]
  %v22 = vld [vmem:[%s1 + $0x40] sm:$0xff]
  %v23 = vld [vmem:[%s1 + $0x48] sm:$0xff]
  %v24 = vld [vmem:[%s1 + $0x50] sm:$0xff]
  %v25 = vld [vmem:[%s1 + $0x58] sm:$0xff]
  %v26 = vld [vmem:[%s1 + $0x60] sm:$0xff]
  %v27 = vld [vmem:[%s1 + $0x68] sm:$0xff]
  %v28 = vld [vmem:[%s1 + $0x70] sm:$0xff]
  %v29 = vld [vmem:[%s1 + $0x78] sm:$0xff]
  %v30 = vld [vmem:[%s0] sm:$0xff]
  %v31 = vld [vmem:[%s0 + $0x8] sm:$0xff]
  %v32 = vld [vmem:[%s0 + $0x10] sm:$0xff]
  %v33 = vld [vmem:[%s0 + $0x18] sm:$0xff]
  %v34 = vld [vmem:[%s0 + $0x20] sm:$0xff]
  %v35 = vld [vmem:[%s0 + $0x28] sm:$0xff]
  %v36 = vld [vmem:[%s0 + $0x30] sm:$0xff]
  %v37 = vld [vmem:[%s0 + $0x38] sm:$0xff]
  %v38 = vld [vmem:[%s0 + $0x40] sm:$0xff]
  %v39 = vld [vmem:[%s0 + $0x48] sm:$0xff]
  %v40 = vld [vmem:[%s0 + $0x50] sm:$0xff]
  %v41 = vld [vmem:[%s0 + $0x58] sm:$0xff]
  %v42 = vld [vmem:[%s0 + $0x60] sm:$0xff]
  %v43 = vld [vmem:[%s0 + $0x68] sm:$0xff]
  %v44 = vld [vmem:[%s0 + $0x70] sm:$0xff]
  %v45 = vld [vmem:[%s0 + $0x78] sm:$0xff]
  %v46 = vld [vmem:[%s0 + $0x80] sm:$0xff]
  %v47 = vld [vmem:[%s0 + $0x88] sm:$0xff]
  %v48 = vld [vmem:[%s0 + $0x90] sm:$0xff]
  %v49 = vld [vmem:[%s0 + $0x98] sm:$0xff]
  %v50 = vld [vmem:[%s0 + $0xa0] sm:$0xff]
  %v51 = vld [vmem:[%s0 + $0xa8] sm:$0xff]
  %v52 = vld [vmem:[%s0 + $0xb0] sm:$0xff]
  %v53 = vld [vmem:[%s0 + $0xb8] sm:$0xff]
  %v54 = vld [vmem:[%s0 + $0xc0] sm:$0xff]
  %v55 = vld [vmem:[%s0 + $0xc8] sm:$0xff]
  %v56 = vld [vmem:[%s0 + $0xd0] sm:$0xff]
  %v57 = vld [vmem:[%s0 + $0xd8] sm:$0xff]
  %v58 = vld [vmem:[%s0 + $0xe0] sm:$0xff]
  %v59 = vld [vmem:[%s0 + $0xe8] sm:$0xff]
  %v60 = vld [vmem:[%s0 + $0xf0] sm:$0xff]
  %v61 = vld [vmem:[%s0 + $0xf8] sm:$0xff]
  %v62 = vld [vmem:[%s0 + $0x100] sm:$0xff]
  %v63 = vld [vmem:[%s0 + $0x108] sm:$0xff]
  %v64 = vld [vmem:[%s0 + $0x110] sm:$0xff]
  %v65 = vld [vmem:[%s0 + $0x118] sm:$0xff]
  %66 = vmatprep.subr.mxu0 0.0
  %67 = vmatpush1.msra.mxu0 %v14
  %68 = vmatprep.subr.mxu0 0.0
  %69 = vmatpush1.msra.mxu0 %v15
  %70 = vmatprep.subr.mxu0 0.0
  %71 = vmatpush1.msra.mxu0 %v16
  %72 = vmatprep.subr.mxu0 0.0
  %73 = vmatpush1.msra.mxu0 %v17
  %74 = vmatprep.subr.mxu0 0.0
  %75 = vmatpush1.msra.mxu0 %v18
  %76 = vmatprep.subr.mxu0 0.0
  %77 = vmatpush1.msra.mxu0 %v19
  %78 = vmatprep.subr.mxu0 0.0
  %79 = vmatpush1.msra.mxu0 %v20
  %80 = vmatprep.subr.mxu0 0.0
  %81 = vmatpush1.msra.mxu0 %v21
  %82 = vmatprep.subr.mxu0 0.0
  %83 = vmatpush1.msra.mxu0 %v22
  %84 = vmatprep.subr.mxu0 0.0
  %85 = vmatpush1.msra.mxu0 %v23
  %86 = vmatprep.subr.mxu0 0.0
  %87 = vmatpush1.msra.mxu0 %v24
  %88 = vmatprep.subr.mxu0 0.0
  %89 = vmatpush1.msra.mxu0 %v25
  %90 = vmatprep.subr.mxu0 0.0
  %91 = vmatpush1.msra.mxu0 %v26
  %92 = vmatprep.subr.mxu0 0.0
  %93 = vmatpush1.msra.mxu0 %v27
  %94 = vmatprep.subr.mxu0 0.0
  %95 = vmatpush1.msra.mxu0 %v28
  %96 = vmatprep.subr.mxu0 0.0
  %97 = vmatpush1.msra.mxu0 %v29
  %98 = vmatprep.subr.mxu0 0.0
  %99 = vmatpush1.msra.mxu0 0.0
  %100 = vmatprep.subr.mxu0 0.0
  %101 = vmatpush1.msra.mxu0 0.0
  %102 = vmatprep.subr.mxu0 0.0
  %103 = vmatpush1.msra.mxu0 0.0
  %104 = vmatprep.subr.mxu0 0.0
  %105 = vmatpush1.msra.mxu0 0.0
  %106 = vmatprep.subr.mxu0 0.0
  %107 = vmatpush1.msra.mxu0 0.0
  %108 = vmatprep.subr.mxu0 0.0
  %109 = vmatpush1.msra.mxu0 0.0
  %110 = vmatprep.subr.mxu0 0.0
  %111 = vmatpush1.msra.mxu0 0.0
  %112 = vmatprep.subr.mxu0 0.0
  %113 = vmatpush1.msra.mxu0 0.0
  %114 = vmatprep.subr.mxu0 0.0
  %115 = vmatpush1.msra.mxu0 0.0
  %116 = vmatprep.subr.mxu0 0.0
  %117 = vmatpush1.msra.mxu0 0.0
  %118 = vmatprep.subr.mxu0 0.0
  %119 = vmatpush1.msra.mxu0 0.0
  %120 = vmatprep.subr.mxu0 0.0
  %121 = vmatpush1.msra.mxu0 0.0
  %122 = vmatprep.subr.mxu0 0.0
  %123 = vmatpush1.msra.mxu0 0.0
  %124 = vmatprep.subr.mxu0 0.0
  %125 = vmatpush1.msra.mxu0 0.0
  %126 = vmatprep.subr.mxu0 0.0
  %127 = vmatpush1.msra.mxu0 0.0
  %128 = vmatprep.subr.mxu0 0.0
  %129 = vmatpush1.msra.mxu0 0.0
  %130 = vmatprep.mubr.f32.mxu0 0.0
  %131 = vmatmul.mubr.f32.gmra.mrb[0].mxu0 %v30
  %v132 = vpop.f32.mrb[0].mxu0
  %v133 = vadd.f32 0.0, %v132
  %v134 = vpop.f32.mrb[0].mxu0
  %135 = vmatprep.mubr.f32.mxu0 0.0
  %136 = vmatmul.mubr.f32.gmra.mrb[0].mxu0 %v31
  %v137 = vpop.f32.mrb[0].mxu0
  %v138 = vadd.f32 0.0, %v137
  %v139 = vpop.f32.mrb[0].mxu0
  %140 = vmatprep.mubr.f32.mxu0 0.0
  %141 = vmatmul.mubr.f32.gmra.mrb[0].mxu0 %v32
  %v142 = vpop.f32.mrb[0].mxu0
  %v143 = vadd.f32 0.0, %v142
  %v144 = vpop.f32.mrb[0].mxu0
  %145 = vmatprep.mubr.f32.mxu0 0.0
  %146 = vmatmul.mubr.f32.gmra.mrb[0].mxu0 %v33
  %v147 = vpop.f32.mrb[0].mxu0
  %v148 = vadd.f32 0.0, %v147
  %v149 = vpop.f32.mrb[0].mxu0
  %150 = vmatprep.mubr.f32.mxu0 0.0
  %151 = vmatmul.mubr.f32.gmra.mrb[0].mxu0 %v34
  %v152 = vpop.f32.mrb[0].mxu0
  %v153 = vadd.f32 0.0, %v152
  %v154 = vpop.f32.mrb[0].mxu0
  %155 = vmatprep.mubr.f32.mxu0 0.0
  %156 = vmatmul.mubr.f32.gmra.mrb[0].mxu0 %v35
  %v157 = vpop.f32.mrb[0].mxu0
  %v158 = vadd.f32 0.0, %v157
  %v159 = vpop.f32.mrb[0].mxu0
  %160 = vmatprep.mubr.f32.mxu0 0.0
  %161 = vmatmul.mubr.f32.gmra.mrb[0].mxu0 %v36
  %v162 = vpop.f32.mrb[0].mxu0
  %v163 = vadd.f32 0.0, %v162
  %v164 = vpop.f32.mrb[0].mxu0
  %165 = vmatprep.mubr.f32.mxu0 0.0
  %166 = vmatmul.mubr.f32.gmra.mrb[0].mxu0 %v37
  %v167 = vpop.f32.mrb[0].mxu0
  %v168 = vadd.f32 0.0, %v167
  %v169 = vpop.f32.mrb[0].mxu0
  %170 = vmatprep.mubr.f32.mxu0 0.0
  %171 = vmatmul.mubr.f32.gmra.mrb[0].mxu0 %v38
  %v172 = vpop.f32.mrb[0].mxu0
  %v173 = vadd.f32 0.0, %v172
  %v174 = vpop.f32.mrb[0].mxu0
  %175 = vmatprep.mubr.f32.mxu0 0.0
  %176 = vmatmul.mubr.f32.gmra.mrb[0].mxu0 %v39
  %v177 = vpop.f32.mrb[0].mxu0
  %v178 = vadd.f32 0.0, %v177
  %v179 = vpop.f32.mrb[0].mxu0
  %180 = vmatprep.mubr.f32.mxu0 0.0
  %181 = vmatmul.mubr.f32.gmra.mrb[0].mxu0 %v40
  %v182 = vpop.f32.mrb[0].mxu0
  %v183 = vadd.f32 0.0, %v182
  %v184 = vpop.f32.mrb[0].mxu0
  %185 = vmatprep.mubr.f32.mxu0 0.0
  %186 = vmatmul.mubr.f32.gmra.mrb[0].mxu0 %v41
  %v187 = vpop.f32.mrb[0].mxu0
  %v188 = vadd.f32 0.0, %v187
  %v189 = vpop.f32.mrb[0].mxu0
  %190 = vmatprep.mubr.f32.mxu0 0.0
  %191 = vmatmul.mubr.f32.gmra.mrb[0].mxu0 %v42
  %v192 = vpop.f32.mrb[0].mxu0
  %v193 = vadd.f32 0.0, %v192
  %v194 = vpop.f32.mrb[0].mxu0
  %195 = vmatprep.mubr.f32.mxu0 0.0
  %196 = vmatmul.mubr.f32.gmra.mrb[0].mxu0 %v43
  %v197 = vpop.f32.mrb[0].mxu0
  %v198 = vadd.f32 0.0, %v197
  %v199 = vpop.f32.mrb[0].mxu0
  %200 = vmatprep.mubr.f32.mxu0 0.0
  %201 = vmatmul.mubr.f32.gmra.mrb[0].mxu0 %v44
  %v202 = vpop.f32.mrb[0].mxu0
  %v203 = vadd.f32 0.0, %v202
  %v204 = vpop.f32.mrb[0].mxu0
  %205 = vmatprep.mubr.f32.mxu0 0.0
  %206 = vmatmul.mubr.f32.gmra.mrb[0].mxu0 %v45
  %v207 = vpop.f32.mrb[0].mxu0
  %v208 = vadd.f32 0.0, %v207
  %v209 = vpop.f32.mrb[0].mxu0
  %210 = vmatprep.mubr.f32.mxu0 0.0
  %211 = vmatmul.mubr.f32.gmra.mrb[0].mxu0 %v46
  %v212 = vpop.f32.mrb[0].mxu0
  %v213 = vadd.f32 0.0, %v212
  %v214 = vpop.f32.mrb[0].mxu0
  %215 = vmatprep.mubr.f32.mxu0 0.0
  %216 = vmatmul.mubr.f32.gmra.mrb[0].mxu0 %v47
  %v217 = vpop.f32.mrb[0].mxu0
  %v218 = vadd.f32 0.0, %v217
  %v219 = vpop.f32.mrb[0].mxu0
  %220 = vmatprep.mubr.f32.mxu0 0.0
  %221 = vmatmul.mubr.f32.gmra.mrb[0].mxu0 %v48
  %v222 = vpop.f32.mrb[0].mxu0
  %v223 = vadd.f32 0.0, %v222
  %v224 = vpop.f32.mrb[0].mxu0
  %225 = vmatprep.mubr.f32.mxu0 0.0
  %226 = vmatmul.mubr.f32.gmra.mrb[0].mxu0 %v49
  %v227 = vpop.f32.mrb[0].mxu0
  %v228 = vadd.f32 0.0, %v227
  %v229 = vpop.f32.mrb[0].mxu0
  %230 = vmatprep.mubr.f32.mxu0 0.0
  %231 = vmatmul.mubr.f32.gmra.mrb[0].mxu0 %v50
  %v232 = vpop.f32.mrb[0].mxu0
  %v233 = vadd.f32 0.0, %v232
  %v234 = vpop.f32.mrb[0].mxu0
  %235 = vmatprep.mubr.f32.mxu0 0.0
  %236 = vmatmul.mubr.f32.gmra.mrb[0].mxu0 %v51
  %v237 = vpop.f32.mrb[0].mxu0
  %v238 = vadd.f32 0.0, %v237
  %v239 = vpop.f32.mrb[0].mxu0
  %240 = vmatprep.mubr.f32.mxu0 0.0
  %241 = vmatmul.mubr.f32.gmra.mrb[0].mxu0 %v52
  %v242 = vpop.f32.mrb[0].mxu0
  %v243 = vadd.f32 0.0, %v242
  %v244 = vpop.f32.mrb[0].mxu0
  %245 = vmatprep.mubr.f32.mxu0 0.0
  %246 = vmatmul.mubr.f32.gmra.mrb[0].mxu0 %v53
  %v247 = vpop.f32.mrb[0].mxu0
  %v248 = vadd.f32 0.0, %v247
  %v249 = vpop.f32.mrb[0].mxu0
  %250 = vmatprep.mubr.f32.mxu0 0.0
  %251 = vmatmul.mubr.f32.gmra.mrb[0].mxu0 %v54
  %v252 = vpop.f32.mrb[0].mxu0
  %v253 = vadd.f32 0.0, %v252
  %v254 = vpop.f32.mrb[0].mxu0
  %255 = vmatprep.mubr.f32.mxu0 0.0
  %256 = vmatmul.mubr.f32.gmra.mrb[0].mxu0 %v55
  %v257 = vpop.f32.mrb[0].mxu0
  %v258 = vadd.f32 0.0, %v257
  %v259 = vpop.f32.mrb[0].mxu0
  %260 = vmatprep.mubr.f32.mxu0 0.0
  %261 = vmatmul.mubr.f32.gmra.mrb[0].mxu0 %v56
  %v262 = vpop.f32.mrb[0].mxu0
  %v263 = vadd.f32 0.0, %v262
  %v264 = vpop.f32.mrb[0].mxu0
  %265 = vmatprep.mubr.f32.mxu0 0.0
  %266 = vmatmul.mubr.f32.gmra.mrb[0].mxu0 %v57
  %v267 = vpop.f32.mrb[0].mxu0
  %v268 = vadd.f32 0.0, %v267
  %v269 = vpop.f32.mrb[0].mxu0
  %270 = vmatprep.mubr.f32.mxu0 0.0
  %271 = vmatmul.mubr.f32.gmra.mrb[0].mxu0 %v58
  %v272 = vpop.f32.mrb[0].mxu0
  %v273 = vadd.f32 0.0, %v272
  %v274 = vpop.f32.mrb[0].mxu0
  %275 = vmatprep.mubr.f32.mxu0 0.0
  %276 = vmatmul.mubr.f32.gmra.mrb[0].mxu0 %v59
  %v277 = vpop.f32.mrb[0].mxu0
  %v278 = vadd.f32 0.0, %v277
  %v279 = vpop.f32.mrb[0].mxu0
  %280 = vmatprep.mubr.f32.mxu0 0.0
  %281 = vmatmul.mubr.f32.gmra.mrb[0].mxu0 %v60
  %v282 = vpop.f32.mrb[0].mxu0
  %v283 = vadd.f32 0.0, %v282
  %v284 = vpop.f32.mrb[0].mxu0
  %285 = vmatprep.mubr.f32.mxu0 0.0
  %286 = vmatmul.mubr.f32.gmra.mrb[0].mxu0 %v61
  %v287 = vpop.f32.mrb[0].mxu0
  %v288 = vadd.f32 0.0, %v287
  %v289 = vpop.f32.mrb[0].mxu0
  %290 = vmatprep.mubr.f32.mxu0 0.0
  %291 = vmatmul.mubr.f32.gmra.mrb[0].mxu0 %v62
  %v292 = vpop.f32.mrb[0].mxu0
  %v293 = vadd.f32 0.0, %v292
  %v294 = vpop.f32.mrb[0].mxu0
  %295 = vmatprep.mubr.f32.mxu0 0.0
  %296 = vmatmul.mubr.f32.gmra.mrb[0].mxu0 %v63
  %v297 = vpop.f32.mrb[0].mxu0
  %v298 = vadd.f32 0.0, %v297
  %v299 = vpop.f32.mrb[0].mxu0
  %300 = vmatprep.mubr.f32.mxu0 0.0
  %301 = vmatmul.mubr.f32.gmra.mrb[0].mxu0 %v64
  %v302 = vpop.f32.mrb[0].mxu0
  %v303 = vadd.f32 0.0, %v302
  %v304 = vpop.f32.mrb[0].mxu0
  %305 = vmatprep.mubr.f32.mxu0 0.0
  %306 = vmatmul.mubr.f32.gmra.mrb[0].mxu0 %v65
  %v307 = vpop.f32.mrb[0].mxu0
  %v308 = vadd.f32 0.0, %v307
  %v309 = vpop.f32.mrb[0].mxu0
  %310 = vdwg.mxu0
  %s311 = scalar_lea.vmem %s0, 288
  %v312 = vld [vmem:[%s311] sm:$0xff]
  %v313 = vld [vmem:[%s311 + $0x8] sm:$0xff]
  %v314 = vld [vmem:[%s311 + $0x10] sm:$0xff]
  %v315 = vld [vmem:[%s311 + $0x18] sm:$0xff]
  %v316 = vld [vmem:[%s311 + $0x20] sm:$0xff]
  %v317 = vld [vmem:[%s311 + $0x28] sm:$0xff]
  %v318 = vld [vmem:[%s311 + $0x30] sm:$0xff]
  %v319 = vld [vmem:[%s311 + $0x38] sm:$0xff]
  %v320 = vld [vmem:[%s311 + $0x40] sm:$0xff]
  %v321 = vld [vmem:[%s311 + $0x48] sm:$0xff]
  %v322 = vld [vmem:[%s311 + $0x50] sm:$0xff]
  %v323 = vld [vmem:[%s311 + $0x58] sm:$0xff]
  %v324 = vld [vmem:[%s311 + $0x60] sm:$0xff]
  %v325 = vld [vmem:[%s311 + $0x68] sm:$0xff]
  %v326 = vld [vmem:[%s311 + $0x70] sm:$0xff]
  %v327 = vld [vmem:[%s311 + $0x78] sm:$0xff]
  %v328 = vld [vmem:[%s311 + $0x80] sm:$0xff]
  %v329 = vld [vmem:[%s311 + $0x88] sm:$0xff]
  %v330 = vld [vmem:[%s311 + $0x90] sm:$0xff]
  %v331 = vld [vmem:[%s311 + $0x98] sm:$0xff]
  %v332 = vld [vmem:[%s311 + $0xa0] sm:$0xff]
  %v333 = vld [vmem:[%s311 + $0xa8] sm:$0xff]
  %v334 = vld [vmem:[%s311 + $0xb0] sm:$0xff]
  %v335 = vld [vmem:[%s311 + $0xb8] sm:$0xff]
  %v336 = vld [vmem:[%s311 + $0xc0] sm:$0xff]
  %v337 = vld [vmem:[%s311 + $0xc8] sm:$0xff]
  %v338 = vld [vmem:[%s311 + $0xd0] sm:$0xff]
  %v339 = vld [vmem:[%s311 + $0xd8] sm:$0xff]
  %v340 = vld [vmem:[%s311 + $0xe0] sm:$0xff]
  %v341 = vld [vmem:[%s311 + $0xe8] sm:$0xff]
  %v342 = vld [vmem:[%s311 + $0xf0] sm:$0xff]
  %v343 = vld [vmem:[%s311 + $0xf8] sm:$0xff]
  %v344 = vld [vmem:[%s311 + $0x100] sm:$0xff]
  %v345 = vld [vmem:[%s311 + $0x108] sm:$0xff]
  %v346 = vld [vmem:[%s311 + $0x110] sm:$0xff]
  %v347 = vld [vmem:[%s311 + $0x118] sm:$0xff]
  %348 = vmatprep.subr.mxu0 0.0
  %349 = vmatpush1.msra.mxu0 %v14
  %350 = vmatprep.subr.mxu0 0.0
  %351 = vmatpush1.msra.mxu0 %v15
  %352 = vmatprep.subr.mxu0 0.0
  %353 = vmatpush1.msra.mxu0 %v16
  %354 = vmatprep.subr.mxu0 0.0
  %355 = vmatpush1.msra.mxu0 %v17
  %356 = vmatprep.subr.mxu0 0.0
  %357 = vmatpush1.msra.mxu0 %v18
  %358 = vmatprep.subr.mxu0 0.0
  %359 = vmatpush1.msra.mxu0 %v19
  %360 = vmatprep.subr.mxu0 0.0
  %361 = vmatpush1.msra.mxu0 %v20
  %362 = vmatprep.subr.mxu0 0.0
  %363 = vmatpush1.msra.mxu0 %v21
  %364 = vmatprep.subr.mxu0 0.0
  %365 = vmatpush1.msra.mxu0 %v22
  %366 = vmatprep.subr.mxu0 0.0
  %367 = vmatpush1.msra.mxu0 %v23
  %368 = vmatprep.subr.mxu0 0.0
  %369 = vmatpush1.msra.mxu0 %v24
  %370 = vmatprep.subr.mxu0 0.0
  %371 = vmatpush1.msra.mxu0 %v25
  %372 = vmatprep.subr.mxu0 0.0
  %373 = vmatpush1.msra.mxu0 %v26
  %374 = vmatprep.subr.mxu0 0.0
  %375 = vmatpush1.msra.mxu0 %v27
  %376 = vmatprep.subr.mxu0 0.0
  %377 = vmatpush1.msra.mxu0 %v28
  %378 = vmatprep.subr.mxu0 0.0
  %379 = vmatpush1.msra.mxu0 %v29
  %380 = vmatprep.subr.mxu0 0.0
  %381 = vmatpush1.msra.mxu0 0.0
  %382 = vmatprep.subr.mxu0 0.0
  %383 = vmatpush1.msra.mxu0 0.0
  %384 = vmatprep.subr.mxu0 0.0
  %385 = vmatpush1.msra.mxu0 0.0
  %386 = vmatprep.subr.mxu0 0.0
  %387 = vmatpush1.msra.mxu0 0.0
  %388 = vmatprep.subr.mxu0 0.0
  %389 = vmatpush1.msra.mxu0 0.0
  %390 = vmatprep.subr.mxu0 0.0
  %391 = vmatpush1.msra.mxu0 0.0
  %392 = vmatprep.subr.mxu0 0.0
  %393 = vmatpush1.msra.mxu0 0.0
  %394 = vmatprep.subr.mxu0 0.0
  %395 = vmatpush1.msra.mxu0 0.0
  %396 = vmatprep.subr.mxu0 0.0
  %397 = vmatpush1.msra.mxu0 0.0
  %398 = vmatprep.subr.mxu0 0.0
  %399 = vmatpush1.msra.mxu0 0.0
  %400 = vmatprep.subr.mxu0 0.0
  %401 = vmatpush1.msra.mxu0 0.0
  %402 = vmatprep.subr.mxu0 0.0
  %403 = vmatpush1.msra.mxu0 0.0
  %404 = vmatprep.subr.mxu0 0.0
  %405 = vmatpush1.msra.mxu0 0.0
  %406 = vmatprep.subr.mxu0 0.0
  %407 = vmatpush1.msra.mxu0 0.0
  %408 = vmatprep.subr.mxu0 0.0
  %409 = vmatpush1.msra.mxu0 0.0
  %410 = vmatprep.subr.mxu0 0.0
  %411 = vmatpush1.msra.mxu0 0.0
  %412 = vmatprep.mubr.f32.mxu0 0.0
  %413 = vmatmul.mubr.f32.gmra.mrb[0].mxu0 %v312
  %v414 = vpop.f32.mrb[0].mxu0
  %v415 = vadd.f32 0.0, %v414
  %v416 = vpop.f32.mrb[0].mxu0
  %417 = vmatprep.mubr.f32.mxu0 0.0
  %418 = vmatmul.mubr.f32.gmra.mrb[0].mxu0 %v313
  %v419 = vpop.f32.mrb[0].mxu0
  %v420 = vadd.f32 0.0, %v419
  %v421 = vpop.f32.mrb[0].mxu0
  %422 = vmatprep.mubr.f32.mxu0 0.0
  %423 = vmatmul.mubr.f32.gmra.mrb[0].mxu0 %v314
  %v424 = vpop.f32.mrb[0].mxu0
  %v425 = vadd.f32 0.0, %v424
  %v426 = vpop.f32.mrb[0].mxu0
  %427 = vmatprep.mubr.f32.mxu0 0.0
  %428 = vmatmul.mubr.f32.gmra.mrb[0].mxu0 %v315
  %v429 = vpop.f32.mrb[0].mxu0
  %v430 = vadd.f32 0.0, %v429
  %v431 = vpop.f32.mrb[0].mxu0
  %432 = vmatprep.mubr.f32.mxu0 0.0
  %433 = vmatmul.mubr.f32.gmra.mrb[0].mxu0 %v316
  %v434 = vpop.f32.mrb[0].mxu0
  %v435 = vadd.f32 0.0, %v434
  %v436 = vpop.f32.mrb[0].mxu0
  %437 = vmatprep.mubr.f32.mxu0 0.0
  %438 = vmatmul.mubr.f32.gmra.mrb[0].mxu0 %v317
  %v439 = vpop.f32.mrb[0].mxu0
  %v440 = vadd.f32 0.0, %v439
  %v441 = vpop.f32.mrb[0].mxu0
  %442 = vmatprep.mubr.f32.mxu0 0.0
  %443 = vmatmul.mubr.f32.gmra.mrb[0].mxu0 %v318
  %v444 = vpop.f32.mrb[0].mxu0
  %v445 = vadd.f32 0.0, %v444
  %v446 = vpop.f32.mrb[0].mxu0
  %447 = vmatprep.mubr.f32.mxu0 0.0
  %448 = vmatmul.mubr.f32.gmra.mrb[0].mxu0 %v319
  %v449 = vpop.f32.mrb[0].mxu0
  %v450 = vadd.f32 0.0, %v449
  %v451 = vpop.f32.mrb[0].mxu0
  %452 = vmatprep.mubr.f32.mxu0 0.0
  %453 = vmatmul.mubr.f32.gmra.mrb[0].mxu0 %v320
  %v454 = vpop.f32.mrb[0].mxu0
  %v455 = vadd.f32 0.0, %v454
  %v456 = vpop.f32.mrb[0].mxu0
  %457 = vmatprep.mubr.f32.mxu0 0.0
  %458 = vmatmul.mubr.f32.gmra.mrb[0].mxu0 %v321
  %v459 = vpop.f32.mrb[0].mxu0
  %v460 = vadd.f32 0.0, %v459
  %v461 = vpop.f32.mrb[0].mxu0
  %462 = vmatprep.mubr.f32.mxu0 0.0
  %463 = vmatmul.mubr.f32.gmra.mrb[0].mxu0 %v322
  %v464 = vpop.f32.mrb[0].mxu0
  %v465 = vadd.f32 0.0, %v464
  %v466 = vpop.f32.mrb[0].mxu0
  %467 = vmatprep.mubr.f32.mxu0 0.0
  %468 = vmatmul.mubr.f32.gmra.mrb[0].mxu0 %v323
  %v469 = vpop.f32.mrb[0].mxu0
  %v470 = vadd.f32 0.0, %v469
  %v471 = vpop.f32.mrb[0].mxu0
  %472 = vmatprep.mubr.f32.mxu0 0.0
  %473 = vmatmul.mubr.f32.gmra.mrb[0].mxu0 %v324
  %v474 = vpop.f32.mrb[0].mxu0
  %v475 = vadd.f32 0.0, %v474
  %v476 = vpop.f32.mrb[0].mxu0
  %477 = vmatprep.mubr.f32.mxu0 0.0
  %478 = vmatmul.mubr.f32.gmra.mrb[0].mxu0 %v325
  %v479 = vpop.f32.mrb[0].mxu0
  %v480 = vadd.f32 0.0, %v479
  %v481 = vpop.f32.mrb[0].mxu0
  %482 = vmatprep.mubr.f32.mxu0 0.0
  %483 = vmatmul.mubr.f32.gmra.mrb[0].mxu0 %v326
  %v484 = vpop.f32.mrb[0].mxu0
  %v485 = vadd.f32 0.0, %v484
  %v486 = vpop.f32.mrb[0].mxu0
  %487 = vmatprep.mubr.f32.mxu0 0.0
  %488 = vmatmul.mubr.f32.gmra.mrb[0].mxu0 %v327
  %v489 = vpop.f32.mrb[0].mxu0
  %v490 = vadd.f32 0.0, %v489
  %v491 = vpop.f32.mrb[0].mxu0
  %492 = vmatprep.mubr.f32.mxu0 0.0
  %493 = vmatmul.mubr.f32.gmra.mrb[0].mxu0 %v328
  %v494 = vpop.f32.mrb[0].mxu0
  %v495 = vadd.f32 0.0, %v494
  %v496 = vpop.f32.mrb[0].mxu0
  %497 = vmatprep.mubr.f32.mxu0 0.0
  %498 = vmatmul.mubr.f32.gmra.mrb[0].mxu0 %v329
  %v499 = vpop.f32.mrb[0].mxu0
  %v500 = vadd.f32 0.0, %v499
  %v501 = vpop.f32.mrb[0].mxu0
  %502 = vmatprep.mubr.f32.mxu0 0.0
  %503 = vmatmul.mubr.f32.gmra.mrb[0].mxu0 %v330
  %v504 = vpop.f32.mrb[0].mxu0
  %v505 = vadd.f32 0.0, %v504
  %v506 = vpop.f32.mrb[0].mxu0
  %507 = vmatprep.mubr.f32.mxu0 0.0
  %508 = vmatmul.mubr.f32.gmra.mrb[0].mxu0 %v331
  %v509 = vpop.f32.mrb[0].mxu0
  %v510 = vadd.f32 0.0, %v509
  %v511 = vpop.f32.mrb[0].mxu0
  %512 = vmatprep.mubr.f32.mxu0 0.0
  %513 = vmatmul.mubr.f32.gmra.mrb[0].mxu0 %v332
  %v514 = vpop.f32.mrb[0].mxu0
  %v515 = vadd.f32 0.0, %v514
  %v516 = vpop.f32.mrb[0].mxu0
  %517 = vmatprep.mubr.f32.mxu0 0.0
  %518 = vmatmul.mubr.f32.gmra.mrb[0].mxu0 %v333
  %v519 = vpop.f32.mrb[0].mxu0
  %v520 = vadd.f32 0.0, %v519
  %v521 = vpop.f32.mrb[0].mxu0
  %522 = vmatprep.mubr.f32.mxu0 0.0
  %523 = vmatmul.mubr.f32.gmra.mrb[0].mxu0 %v334
  %v524 = vpop.f32.mrb[0].mxu0
  %v525 = vadd.f32 0.0, %v524
  %v526 = vpop.f32.mrb[0].mxu0
  %527 = vmatprep.mubr.f32.mxu0 0.0
  %528 = vmatmul.mubr.f32.gmra.mrb[0].mxu0 %v335
  %v529 = vpop.f32.mrb[0].mxu0
  %v530 = vadd.f32 0.0, %v529
  %v531 = vpop.f32.mrb[0].mxu0
  %532 = vmatprep.mubr.f32.mxu0 0.0
  %533 = vmatmul.mubr.f32.gmra.mrb[0].mxu0 %v336
  %v534 = vpop.f32.mrb[0].mxu0
  %v535 = vadd.f32 0.0, %v534
  %v536 = vpop.f32.mrb[0].mxu0
  %537 = vmatprep.mubr.f32.mxu0 0.0
  %538 = vmatmul.mubr.f32.gmra.mrb[0].mxu0 %v337
  %v539 = vpop.f32.mrb[0].mxu0
  %v540 = vadd.f32 0.0, %v539
  %v541 = vpop.f32.mrb[0].mxu0
  %542 = vmatprep.mubr.f32.mxu0 0.0
  %543 = vmatmul.mubr.f32.gmra.mrb[0].mxu0 %v338
  %v544 = vpop.f32.mrb[0].mxu0
  %v545 = vadd.f32 0.0, %v544
  %v546 = vpop.f32.mrb[0].mxu0
  %547 = vmatprep.mubr.f32.mxu0 0.0
  %548 = vmatmul.mubr.f32.gmra.mrb[0].mxu0 %v339
  %v549 = vpop.f32.mrb[0].mxu0
  %v550 = vadd.f32 0.0, %v549
  %v551 = vpop.f32.mrb[0].mxu0
  %552 = vmatprep.mubr.f32.mxu0 0.0
  %553 = vmatmul.mubr.f32.gmra.mrb[0].mxu0 %v340
  %v554 = vpop.f32.mrb[0].mxu0
  %v555 = vadd.f32 0.0, %v554
  %v556 = vpop.f32.mrb[0].mxu0
  %557 = vmatprep.mubr.f32.mxu0 0.0
  %558 = vmatmul.mubr.f32.gmra.mrb[0].mxu0 %v341
  %v559 = vpop.f32.mrb[0].mxu0
  %v560 = vadd.f32 0.0, %v559
  %v561 = vpop.f32.mrb[0].mxu0
  %562 = vmatprep.mubr.f32.mxu0 0.0
  %563 = vmatmul.mubr.f32.gmra.mrb[0].mxu0 %v342
  %v564 = vpop.f32.mrb[0].mxu0
  %v565 = vadd.f32 0.0, %v564
  %v566 = vpop.f32.mrb[0].mxu0
  %567 = vmatprep.mubr.f32.mxu0 0.0
  %568 = vmatmul.mubr.f32.gmra.mrb[0].mxu0 %v343
  %v569 = vpop.f32.mrb[0].mxu0
  %v570 = vadd.f32 0.0, %v569
  %v571 = vpop.f32.mrb[0].mxu0
  %572 = vmatprep.mubr.f32.mxu0 0.0
  %573 = vmatmul.mubr.f32.gmra.mrb[0].mxu0 %v344
  %v574 = vpop.f32.mrb[0].mxu0
  %v575 = vadd.f32 0.0, %v574
  %v576 = vpop.f32.mrb[0].mxu0
  %577 = vmatprep.mubr.f32.mxu0 0.0
  %578 = vmatmul.mubr.f32.gmra.mrb[0].mxu0 %v345
  %v579 = vpop.f32.mrb[0].mxu0
  %v580 = vadd.f32 0.0, %v579
  %v581 = vpop.f32.mrb[0].mxu0
  %582 = vmatprep.mubr.f32.mxu0 0.0
  %583 = vmatmul.mubr.f32.gmra.mrb[0].mxu0 %v346
  %v584 = vpop.f32.mrb[0].mxu0
  %v585 = vadd.f32 0.0, %v584
  %v586 = vpop.f32.mrb[0].mxu0
  %587 = vmatprep.mubr.f32.mxu0 0.0
  %588 = vmatmul.mubr.f32.gmra.mrb[0].mxu0 %v347
  %v589 = vpop.f32.mrb[0].mxu0
  %v590 = vadd.f32 0.0, %v589
  %v591 = vpop.f32.mrb[0].mxu0
  %592 = vdwg.mxu0
  %v593 = vmax.f32 %v133, %v415
  %v594 = vmax.f32 %v138, %v420
  %v595 = vmax.f32 %v143, %v425
  %v596 = vmax.f32 %v148, %v430
  %v597 = vmax.f32 %v153, %v435
  %v598 = vmax.f32 %v158, %v440
  %v599 = vmax.f32 %v163, %v445
  %v600 = vmax.f32 %v168, %v450
  %v601 = vmax.f32 %v173, %v455
  %v602 = vmax.f32 %v178, %v460
  %v603 = vmax.f32 %v183, %v465
  %v604 = vmax.f32 %v188, %v470
  %v605 = vmax.f32 %v193, %v475
  %v606 = vmax.f32 %v198, %v480
  %v607 = vmax.f32 %v203, %v485
  %v608 = vmax.f32 %v208, %v490
  %v609 = vmax.f32 %v213, %v495
  %v610 = vmax.f32 %v218, %v500
  %v611 = vmax.f32 %v223, %v505
  %v612 = vmax.f32 %v228, %v510
  %v613 = vmax.f32 %v233, %v515
  %v614 = vmax.f32 %v238, %v520
  %v615 = vmax.f32 %v243, %v525
  %v616 = vmax.f32 %v248, %v530
  %v617 = vmax.f32 %v253, %v535
  %v618 = vmax.f32 %v258, %v540
  %v619 = vmax.f32 %v263, %v545
  %v620 = vmax.f32 %v268, %v550
  %v621 = vmax.f32 %v273, %v555
  %v622 = vmax.f32 %v278, %v560
  %v623 = vmax.f32 %v283, %v565
  %v624 = vmax.f32 %v288, %v570
  %v625 = vmax.f32 %v293, %v575
  %v626 = vmax.f32 %v298, %v580
  %v627 = vmax.f32 %v303, %v585
  %v628 = vmax.f32 %v308, %v590
  %s629 = scalar_lea.vmem %s0, 576
  %v630 = vld [vmem:[%s629] sm:$0xff]
  %v631 = vld [vmem:[%s629 + $0x8] sm:$0xff]
  %v632 = vld [vmem:[%s629 + $0x10] sm:$0xff]
  %v633 = vld [vmem:[%s629 + $0x18] sm:$0xff]
  %v634 = vld [vmem:[%s629 + $0x20] sm:$0xff]
  %v635 = vld [vmem:[%s629 + $0x28] sm:$0xff]
  %v636 = vld [vmem:[%s629 + $0x30] sm:$0xff]
  %v637 = vld [vmem:[%s629 + $0x38] sm:$0xff]
  %v638 = vld [vmem:[%s629 + $0x40] sm:$0xff]
  %v639 = vld [vmem:[%s629 + $0x48] sm:$0xff]
  %v640 = vld [vmem:[%s629 + $0x50] sm:$0xff]
  %v641 = vld [vmem:[%s629 + $0x58] sm:$0xff]
  %v642 = vld [vmem:[%s629 + $0x60] sm:$0xff]
  %v643 = vld [vmem:[%s629 + $0x68] sm:$0xff]
  %v644 = vld [vmem:[%s629 + $0x70] sm:$0xff]
  %v645 = vld [vmem:[%s629 + $0x78] sm:$0xff]
  %v646 = vld [vmem:[%s629 + $0x80] sm:$0xff]
  %v647 = vld [vmem:[%s629 + $0x88] sm:$0xff]
  %v648 = vld [vmem:[%s629 + $0x90] sm:$0xff]
  %v649 = vld [vmem:[%s629 + $0x98] sm:$0xff]
  %v650 = vld [vmem:[%s629 + $0xa0] sm:$0xff]
  %v651 = vld [vmem:[%s629 + $0xa8] sm:$0xff]
  %v652 = vld [vmem:[%s629 + $0xb0] sm:$0xff]
  %v653 = vld [vmem:[%s629 + $0xb8] sm:$0xff]
  %v654 = vld [vmem:[%s629 + $0xc0] sm:$0xff]
  %v655 = vld [vmem:[%s629 + $0xc8] sm:$0xff]
  %v656 = vld [vmem:[%s629 + $0xd0] sm:$0xff]
  %v657 = vld [vmem:[%s629 + $0xd8] sm:$0xff]
  %v658 = vld [vmem:[%s629 + $0xe0] sm:$0xff]
  %v659 = vld [vmem:[%s629 + $0xe8] sm:$0xff]
  %v660 = vld [vmem:[%s629 + $0xf0] sm:$0xff]
  %v661 = vld [vmem:[%s629 + $0xf8] sm:$0xff]
  %v662 = vld [vmem:[%s629 + $0x100] sm:$0xff]
  %v663 = vld [vmem:[%s629 + $0x108] sm:$0xff]
  %v664 = vld [vmem:[%s629 + $0x110] sm:$0xff]
  %v665 = vld [vmem:[%s629 + $0x118] sm:$0xff]
  %666 = vmatprep.subr.mxu0 0.0
  %667 = vmatpush1.msra.mxu0 %v14
  %668 = vmatprep.subr.mxu0 0.0
  %669 = vmatpush1.msra.mxu0 %v15
  %670 = vmatprep.subr.mxu0 0.0
  %671 = vmatpush1.msra.mxu0 %v16
  %672 = vmatprep.subr.mxu0 0.0
  %673 = vmatpush1.msra.mxu0 %v17
  %674 = vmatprep.subr.mxu0 0.0
  %675 = vmatpush1.msra.mxu0 %v18
  %676 = vmatprep.subr.mxu0 0.0
  %677 = vmatpush1.msra.mxu0 %v19
  %678 = vmatprep.subr.mxu0 0.0
  %679 = vmatpush1.msra.mxu0 %v20
  %680 = vmatprep.subr.mxu0 0.0
  %681 = vmatpush1.msra.mxu0 %v21
  %682 = vmatprep.subr.mxu0 0.0
  %683 = vmatpush1.msra.mxu0 %v22
  %684 = vmatprep.subr.mxu0 0.0
  %685 = vmatpush1.msra.mxu0 %v23
  %686 = vmatprep.subr.mxu0 0.0
  %687 = vmatpush1.msra.mxu0 %v24
  %688 = vmatprep.subr.mxu0 0.0
  %689 = vmatpush1.msra.mxu0 %v25
  %690 = vmatprep.subr.mxu0 0.0
  %691 = vmatpush1.msra.mxu0 %v26
  %692 = vmatprep.subr.mxu0 0.0
  %693 = vmatpush1.msra.mxu0 %v27
  %694 = vmatprep.subr.mxu0 0.0
  %695 = vmatpush1.msra.mxu0 %v28
  %696 = vmatprep.subr.mxu0 0.0
  %697 = vmatpush1.msra.mxu0 %v29
  %698 = vmatprep.subr.mxu0 0.0
  %699 = vmatpush1.msra.mxu0 0.0
  %700 = vmatprep.subr.mxu0 0.0
  %701 = vmatpush1.msra.mxu0 0.0
  %702 = vmatprep.subr.mxu0 0.0
  %703 = vmatpush1.msra.mxu0 0.0
  %704 = vmatprep.subr.mxu0 0.0
  %705 = vmatpush1.msra.mxu0 0.0
  %706 = vmatprep.subr.mxu0 0.0
  %707 = vmatpush1.msra.mxu0 0.0
  %708 = vmatprep.subr.mxu0 0.0
  %709 = vmatpush1.msra.mxu0 0.0
  %710 = vmatprep.subr.mxu0 0.0
  %711 = vmatpush1.msra.mxu0 0.0
  %712 = vmatprep.subr.mxu0 0.0
  %713 = vmatpush1.msra.mxu0 0.0
  %714 = vmatprep.subr.mxu0 0.0
  %715 = vmatpush1.msra.mxu0 0.0
  %716 = vmatprep.subr.mxu0 0.0
  %717 = vmatpush1.msra.mxu0 0.0
  %718 = vmatprep.subr.mxu0 0.0
  %719 = vmatpush1.msra.mxu0 0.0
  %720 = vmatprep.subr.mxu0 0.0
  %721 = vmatpush1.msra.mxu0 0.0
  %722 = vmatprep.subr.mxu0 0.0
  %723 = vmatpush1.msra.mxu0 0.0
  %724 = vmatprep.subr.mxu0 0.0
  %725 = vmatpush1.msra.mxu0 0.0
  %726 = vmatprep.subr.mxu0 0.0
  %727 = vmatpush1.msra.mxu0 0.0
  %728 = vmatprep.subr.mxu0 0.0
  %729 = vmatpush1.msra.mxu0 0.0
  %730 = vmatprep.mubr.f32.mxu0 0.0
  %731 = vmatmul.mubr.f32.gmra.mrb[0].mxu0 %v630
  %v732 = vpop.f32.mrb[0].mxu0
  %v733 = vadd.f32 0.0, %v732
  %v734 = vpop.f32.mrb[0].mxu0
  %735 = vmatprep.mubr.f32.mxu0 0.0
  %736 = vmatmul.mubr.f32.gmra.mrb[0].mxu0 %v631
  %v737 = vpop.f32.mrb[0].mxu0
  %v738 = vadd.f32 0.0, %v737
  %v739 = vpop.f32.mrb[0].mxu0
  %740 = vmatprep.mubr.f32.mxu0 0.0
  %741 = vmatmul.mubr.f32.gmra.mrb[0].mxu0 %v632
  %v742 = vpop.f32.mrb[0].mxu0
  %v743 = vadd.f32 0.0, %v742
  %v744 = vpop.f32.mrb[0].mxu0
  %745 = vmatprep.mubr.f32.mxu0 0.0
  %746 = vmatmul.mubr.f32.gmra.mrb[0].mxu0 %v633
  %v747 = vpop.f32.mrb[0].mxu0
  %v748 = vadd.f32 0.0, %v747
  %v749 = vpop.f32.mrb[0].mxu0
  %750 = vmatprep.mubr.f32.mxu0 0.0
  %751 = vmatmul.mubr.f32.gmra.mrb[0].mxu0 %v634
  %v752 = vpop.f32.mrb[0].mxu0
  %v753 = vadd.f32 0.0, %v752
  %v754 = vpop.f32.mrb[0].mxu0
  %755 = vmatprep.mubr.f32.mxu0 0.0
  %756 = vmatmul.mubr.f32.gmra.mrb[0].mxu0 %v635
  %v757 = vpop.f32.mrb[0].mxu0
  %v758 = vadd.f32 0.0, %v757
  %v759 = vpop.f32.mrb[0].mxu0
  %760 = vmatprep.mubr.f32.mxu0 0.0
  %761 = vmatmul.mubr.f32.gmra.mrb[0].mxu0 %v636
  %v762 = vpop.f32.mrb[0].mxu0
  %v763 = vadd.f32 0.0, %v762
  %v764 = vpop.f32.mrb[0].mxu0
  %765 = vmatprep.mubr.f32.mxu0 0.0
  %766 = vmatmul.mubr.f32.gmra.mrb[0].mxu0 %v637
  %v767 = vpop.f32.mrb[0].mxu0
  %v768 = vadd.f32 0.0, %v767
  %v769 = vpop.f32.mrb[0].mxu0
  %770 = vmatprep.mubr.f32.mxu0 0.0
  %771 = vmatmul.mubr.f32.gmra.mrb[0].mxu0 %v638
  %v772 = vpop.f32.mrb[0].mxu0
  %v773 = vadd.f32 0.0, %v772
  %v774 = vpop.f32.mrb[0].mxu0
  %775 = vmatprep.mubr.f32.mxu0 0.0
  %776 = vmatmul.mubr.f32.gmra.mrb[0].mxu0 %v639
  %v777 = vpop.f32.mrb[0].mxu0
  %v778 = vadd.f32 0.0, %v777
  %v779 = vpop.f32.mrb[0].mxu0
  %780 = vmatprep.mubr.f32.mxu0 0.0
  %781 = vmatmul.mubr.f32.gmra.mrb[0].mxu0 %v640
  %v782 = vpop.f32.mrb[0].mxu0
  %v783 = vadd.f32 0.0, %v782
  %v784 = vpop.f32.mrb[0].mxu0
  %785 = vmatprep.mubr.f32.mxu0 0.0
  %786 = vmatmul.mubr.f32.gmra.mrb[0].mxu0 %v641
  %v787 = vpop.f32.mrb[0].mxu0
  %v788 = vadd.f32 0.0, %v787
  %v789 = vpop.f32.mrb[0].mxu0
  %790 = vmatprep.mubr.f32.mxu0 0.0
  %791 = vmatmul.mubr.f32.gmra.mrb[0].mxu0 %v642
  %v792 = vpop.f32.mrb[0].mxu0
  %v793 = vadd.f32 0.0, %v792
  %v794 = vpop.f32.mrb[0].mxu0
  %795 = vmatprep.mubr.f32.mxu0 0.0
  %796 = vmatmul.mubr.f32.gmra.mrb[0].mxu0 %v643
  %v797 = vpop.f32.mrb[0].mxu0
  %v798 = vadd.f32 0.0, %v797
  %v799 = vpop.f32.mrb[0].mxu0
  %800 = vmatprep.mubr.f32.mxu0 0.0
  %801 = vmatmul.mubr.f32.gmra.mrb[0].mxu0 %v644
  %v802 = vpop.f32.mrb[0].mxu0
  %v803 = vadd.f32 0.0, %v802
  %v804 = vpop.f32.mrb[0].mxu0
  %805 = vmatprep.mubr.f32.mxu0 0.0
  %806 = vmatmul.mubr.f32.gmra.mrb[0].mxu0 %v645
  %v807 = vpop.f32.mrb[0].mxu0
  %v808 = vadd.f32 0.0, %v807
  %v809 = vpop.f32.mrb[0].mxu0
  %810 = vmatprep.mubr.f32.mxu0 0.0
  %811 = vmatmul.mubr.f32.gmra.mrb[0].mxu0 %v646
  %v812 = vpop.f32.mrb[0].mxu0
  %v813 = vadd.f32 0.0, %v812
  %v814 = vpop.f32.mrb[0].mxu0
  %815 = vmatprep.mubr.f32.mxu0 0.0
  %816 = vmatmul.mubr.f32.gmra.mrb[0].mxu0 %v647
  %v817 = vpop.f32.mrb[0].mxu0
  %v818 = vadd.f32 0.0, %v817
  %v819 = vpop.f32.mrb[0].mxu0
  %820 = vmatprep.mubr.f32.mxu0 0.0
  %821 = vmatmul.mubr.f32.gmra.mrb[0].mxu0 %v648
  %v822 = vpop.f32.mrb[0].mxu0
  %v823 = vadd.f32 0.0, %v822
  %v824 = vpop.f32.mrb[0].mxu0
  %825 = vmatprep.mubr.f32.mxu0 0.0
  %826 = vmatmul.mubr.f32.gmra.mrb[0].mxu0 %v649
  %v827 = vpop.f32.mrb[0].mxu0
  %v828 = vadd.f32 0.0, %v827
  %v829 = vpop.f32.mrb[0].mxu0
  %830 = vmatprep.mubr.f32.mxu0 0.0
  %831 = vmatmul.mubr.f32.gmra.mrb[0].mxu0 %v650
  %v832 = vpop.f32.mrb[0].mxu0
  %v833 = vadd.f32 0.0, %v832
  %v834 = vpop.f32.mrb[0].mxu0
  %835 = vmatprep.mubr.f32.mxu0 0.0
  %836 = vmatmul.mubr.f32.gmra.mrb[0].mxu0 %v651
  %v837 = vpop.f32.mrb[0].mxu0
  %v838 = vadd.f32 0.0, %v837
  %v839 = vpop.f32.mrb[0].mxu0
  %840 = vmatprep.mubr.f32.mxu0 0.0
  %841 = vmatmul.mubr.f32.gmra.mrb[0].mxu0 %v652
  %v842 = vpop.f32.mrb[0].mxu0
  %v843 = vadd.f32 0.0, %v842
  %v844 = vpop.f32.mrb[0].mxu0
  %845 = vmatprep.mubr.f32.mxu0 0.0
  %846 = vmatmul.mubr.f32.gmra.mrb[0].mxu0 %v653
  %v847 = vpop.f32.mrb[0].mxu0
  %v848 = vadd.f32 0.0, %v847
  %v849 = vpop.f32.mrb[0].mxu0
  %850 = vmatprep.mubr.f32.mxu0 0.0
  %851 = vmatmul.mubr.f32.gmra.mrb[0].mxu0 %v654
  %v852 = vpop.f32.mrb[0].mxu0
  %v853 = vadd.f32 0.0, %v852
  %v854 = vpop.f32.mrb[0].mxu0
  %855 = vmatprep.mubr.f32.mxu0 0.0
  %856 = vmatmul.mubr.f32.gmra.mrb[0].mxu0 %v655
  %v857 = vpop.f32.mrb[0].mxu0
  %v858 = vadd.f32 0.0, %v857
  %v859 = vpop.f32.mrb[0].mxu0
  %860 = vmatprep.mubr.f32.mxu0 0.0
  %861 = vmatmul.mubr.f32.gmra.mrb[0].mxu0 %v656
  %v862 = vpop.f32.mrb[0].mxu0
  %v863 = vadd.f32 0.0, %v862
  %v864 = vpop.f32.mrb[0].mxu0
  %865 = vmatprep.mubr.f32.mxu0 0.0
  %866 = vmatmul.mubr.f32.gmra.mrb[0].mxu0 %v657
  %v867 = vpop.f32.mrb[0].mxu0
  %v868 = vadd.f32 0.0, %v867
  %v869 = vpop.f32.mrb[0].mxu0
  %870 = vmatprep.mubr.f32.mxu0 0.0
  %871 = vmatmul.mubr.f32.gmra.mrb[0].mxu0 %v658
  %v872 = vpop.f32.mrb[0].mxu0
  %v873 = vadd.f32 0.0, %v872
  %v874 = vpop.f32.mrb[0].mxu0
  %875 = vmatprep.mubr.f32.mxu0 0.0
  %876 = vmatmul.mubr.f32.gmra.mrb[0].mxu0 %v659
  %v877 = vpop.f32.mrb[0].mxu0
  %v878 = vadd.f32 0.0, %v877
  %v879 = vpop.f32.mrb[0].mxu0
  %880 = vmatprep.mubr.f32.mxu0 0.0
  %881 = vmatmul.mubr.f32.gmra.mrb[0].mxu0 %v660
  %v882 = vpop.f32.mrb[0].mxu0
  %v883 = vadd.f32 0.0, %v882
  %v884 = vpop.f32.mrb[0].mxu0
  %885 = vmatprep.mubr.f32.mxu0 0.0
  %886 = vmatmul.mubr.f32.gmra.mrb[0].mxu0 %v661
  %v887 = vpop.f32.mrb[0].mxu0
  %v888 = vadd.f32 0.0, %v887
  %v889 = vpop.f32.mrb[0].mxu0
  %890 = vmatprep.mubr.f32.mxu0 0.0
  %891 = vmatmul.mubr.f32.gmra.mrb[0].mxu0 %v662
  %v892 = vpop.f32.mrb[0].mxu0
  %v893 = vadd.f32 0.0, %v892
  %v894 = vpop.f32.mrb[0].mxu0
  %895 = vmatprep.mubr.f32.mxu0 0.0
  %896 = vmatmul.mubr.f32.gmra.mrb[0].mxu0 %v663
  %v897 = vpop.f32.mrb[0].mxu0
  %v898 = vadd.f32 0.0, %v897
  %v899 = vpop.f32.mrb[0].mxu0
  %900 = vmatprep.mubr.f32.mxu0 0.0
  %901 = vmatmul.mubr.f32.gmra.mrb[0].mxu0 %v664
  %v902 = vpop.f32.mrb[0].mxu0
  %v903 = vadd.f32 0.0, %v902
  %v904 = vpop.f32.mrb[0].mxu0
  %905 = vmatprep.mubr.f32.mxu0 0.0
  %906 = vmatmul.mubr.f32.gmra.mrb[0].mxu0 %v665
  %v907 = vpop.f32.mrb[0].mxu0
  %v908 = vadd.f32 0.0, %v907
  %v909 = vpop.f32.mrb[0].mxu0
  %910 = vdwg.mxu0
  %v911 = vmax.f32 %v593, %v733
  %v912 = vmax.f32 %v594, %v738
  %v913 = vmax.f32 %v595, %v743
  %v914 = vmax.f32 %v596, %v748
  %v915 = vmax.f32 %v597, %v753
  %v916 = vmax.f32 %v598, %v758
  %v917 = vmax.f32 %v599, %v763
  %v918 = vmax.f32 %v600, %v768
  %v919 = vmax.f32 %v601, %v773
  %v920 = vmax.f32 %v602, %v778
  %v921 = vmax.f32 %v603, %v783
  %v922 = vmax.f32 %v604, %v788
  %v923 = vmax.f32 %v605, %v793
  %v924 = vmax.f32 %v606, %v798
  %v925 = vmax.f32 %v607, %v803
  %v926 = vmax.f32 %v608, %v808
  %v927 = vmax.f32 %v609, %v813
  %v928 = vmax.f32 %v610, %v818
  %v929 = vmax.f32 %v611, %v823
  %v930 = vmax.f32 %v612, %v828
  %v931 = vmax.f32 %v613, %v833
  %v932 = vmax.f32 %v614, %v838
  %v933 = vmax.f32 %v615, %v843
  %v934 = vmax.f32 %v616, %v848
  %v935 = vmax.f32 %v617, %v853
  %v936 = vmax.f32 %v618, %v858
  %v937 = vmax.f32 %v619, %v863
  %v938 = vmax.f32 %v620, %v868
  %v939 = vmax.f32 %v621, %v873
  %v940 = vmax.f32 %v622, %v878
  %v941 = vmax.f32 %v623, %v883
  %v942 = vmax.f32 %v624, %v888
  %v943 = vmax.f32 %v625, %v893
  %v944 = vmax.f32 %v626, %v898
  %v945 = vmax.f32 %v627, %v903
  %v946 = vmax.f32 %v628, %v908
  %s947 = scalar_lea.vmem %s0, 864
  %v948 = vld [vmem:[%s947] sm:$0xff]
  %v949 = vld [vmem:[%s947 + $0x8] sm:$0xff]
  %v950 = vld [vmem:[%s947 + $0x10] sm:$0xff]
  %v951 = vld [vmem:[%s947 + $0x18] sm:$0xff]
  %v952 = vld [vmem:[%s947 + $0x20] sm:$0xff]
  %v953 = vld [vmem:[%s947 + $0x28] sm:$0xff]
  %v954 = vld [vmem:[%s947 + $0x30] sm:$0xff]
  %v955 = vld [vmem:[%s947 + $0x38] sm:$0xff]
  %v956 = vld [vmem:[%s947 + $0x40] sm:$0xff]
  %v957 = vld [vmem:[%s947 + $0x48] sm:$0xff]
  %v958 = vld [vmem:[%s947 + $0x50] sm:$0xff]
  %v959 = vld [vmem:[%s947 + $0x58] sm:$0xff]
  %v960 = vld [vmem:[%s947 + $0x60] sm:$0xff]
  %v961 = vld [vmem:[%s947 + $0x68] sm:$0xff]
  %v962 = vld [vmem:[%s947 + $0x70] sm:$0xff]
  %v963 = vld [vmem:[%s947 + $0x78] sm:$0xff]
  %v964 = vld [vmem:[%s947 + $0x80] sm:$0xff]
  %v965 = vld [vmem:[%s947 + $0x88] sm:$0xff]
  %v966 = vld [vmem:[%s947 + $0x90] sm:$0xff]
  %v967 = vld [vmem:[%s947 + $0x98] sm:$0xff]
  %v968 = vld [vmem:[%s947 + $0xa0] sm:$0xff]
  %v969 = vld [vmem:[%s947 + $0xa8] sm:$0xff]
  %v970 = vld [vmem:[%s947 + $0xb0] sm:$0xff]
  %v971 = vld [vmem:[%s947 + $0xb8] sm:$0xff]
  %v972 = vld [vmem:[%s947 + $0xc0] sm:$0xff]
  %v973 = vld [vmem:[%s947 + $0xc8] sm:$0xff]
  %v974 = vld [vmem:[%s947 + $0xd0] sm:$0xff]
  %v975 = vld [vmem:[%s947 + $0xd8] sm:$0xff]
  %v976 = vld [vmem:[%s947 + $0xe0] sm:$0xff]
  %v977 = vld [vmem:[%s947 + $0xe8] sm:$0xff]
  %v978 = vld [vmem:[%s947 + $0xf0] sm:$0xff]
  %v979 = vld [vmem:[%s947 + $0xf8] sm:$0xff]
  %v980 = vld [vmem:[%s947 + $0x100] sm:$0xff]
  %v981 = vld [vmem:[%s947 + $0x108] sm:$0xff]
  %v982 = vld [vmem:[%s947 + $0x110] sm:$0xff]
  %v983 = vld [vmem:[%s947 + $0x118] sm:$0xff]
  %984 = vmatprep.subr.mxu0 0.0
  %985 = vmatpush1.msra.mxu0 %v14
  %986 = vmatprep.subr.mxu0 0.0
  %987 = vmatpush1.msra.mxu0 %v15
  %988 = vmatprep.subr.mxu0 0.0
  %989 = vmatpush1.msra.mxu0 %v16
  %990 = vmatprep.subr.mxu0 0.0
  %991 = vmatpush1.msra.mxu0 %v17
  %992 = vmatprep.subr.mxu0 0.0
  %993 = vmatpush1.msra.mxu0 %v18
  %994 = vmatprep.subr.mxu0 0.0
  %995 = vmatpush1.msra.mxu0 %v19
  %996 = vmatprep.subr.mxu0 0.0
  %997 = vmatpush1.msra.mxu0 %v20
  %998 = vmatprep.subr.mxu0 0.0
  %999 = vmatpush1.msra.mxu0 %v21
  %1000 = vmatprep.subr.mxu0 0.0
  %1001 = vmatpush1.msra.mxu0 %v22
  %1002 = vmatprep.subr.mxu0 0.0
  %1003 = vmatpush1.msra.mxu0 %v23
  %1004 = vmatprep.subr.mxu0 0.0
  %1005 = vmatpush1.msra.mxu0 %v24
  %1006 = vmatprep.subr.mxu0 0.0
  %1007 = vmatpush1.msra.mxu0 %v25
  %1008 = vmatprep.subr.mxu0 0.0
  %1009 = vmatpush1.msra.mxu0 %v26
  %1010 = vmatprep.subr.mxu0 0.0
  %1011 = vmatpush1.msra.mxu0 %v27
  %1012 = vmatprep.subr.mxu0 0.0
  %1013 = vmatpush1.msra.mxu0 %v28
  %1014 = vmatprep.subr.mxu0 0.0
  %1015 = vmatpush1.msra.mxu0 %v29
  %1016 = vmatprep.subr.mxu0 0.0
  %1017 = vmatpush1.msra.mxu0 0.0
  %1018 = vmatprep.subr.mxu0 0.0
  %1019 = vmatpush1.msra.mxu0 0.0
  %1020 = vmatprep.subr.mxu0 0.0
  %1021 = vmatpush1.msra.mxu0 0.0
  %1022 = vmatprep.subr.mxu0 0.0
  %1023 = vmatpush1.msra.mxu0 0.0
  %1024 = vmatprep.subr.mxu0 0.0
  %1025 = vmatpush1.msra.mxu0 0.0
  %1026 = vmatprep.subr.mxu0 0.0
  %1027 = vmatpush1.msra.mxu0 0.0
  %1028 = vmatprep.subr.mxu0 0.0
  %1029 = vmatpush1.msra.mxu0 0.0
  %1030 = vmatprep.subr.mxu0 0.0
  %1031 = vmatpush1.msra.mxu0 0.0
  %1032 = vmatprep.subr.mxu0 0.0
  %1033 = vmatpush1.msra.mxu0 0.0
  %1034 = vmatprep.subr.mxu0 0.0
  %1035 = vmatpush1.msra.mxu0 0.0
  %1036 = vmatprep.subr.mxu0 0.0
  %1037 = vmatpush1.msra.mxu0 0.0
  %1038 = vmatprep.subr.mxu0 0.0
  %1039 = vmatpush1.msra.mxu0 0.0
  %1040 = vmatprep.subr.mxu0 0.0
  %1041 = vmatpush1.msra.mxu0 0.0
  %1042 = vmatprep.subr.mxu0 0.0
  %1043 = vmatpush1.msra.mxu0 0.0
  %1044 = vmatprep.subr.mxu0 0.0
  %1045 = vmatpush1.msra.mxu0 0.0
  %1046 = vmatprep.subr.mxu0 0.0
  %1047 = vmatpush1.msra.mxu0 0.0
  %1048 = vmatprep.mubr.f32.mxu0 0.0
  %1049 = vmatmul.mubr.f32.gmra.mrb[0].mxu0 %v948
  %v1050 = vpop.f32.mrb[0].mxu0
  %v1051 = vadd.f32 0.0, %v1050
  %v1052 = vpop.f32.mrb[0].mxu0
  %1053 = vmatprep.mubr.f32.mxu0 0.0
  %1054 = vmatmul.mubr.f32.gmra.mrb[0].mxu0 %v949
  %v1055 = vpop.f32.mrb[0].mxu0
  %v1056 = vadd.f32 0.0, %v1055
  %v1057 = vpop.f32.mrb[0].mxu0
  %1058 = vmatprep.mubr.f32.mxu0 0.0
  %1059 = vmatmul.mubr.f32.gmra.mrb[0].mxu0 %v950
  %v1060 = vpop.f32.mrb[0].mxu0
  %v1061 = vadd.f32 0.0, %v1060
  %v1062 = vpop.f32.mrb[0].mxu0
  %1063 = vmatprep.mubr.f32.mxu0 0.0
  %1064 = vmatmul.mubr.f32.gmra.mrb[0].mxu0 %v951
  %v1065 = vpop.f32.mrb[0].mxu0
  %v1066 = vadd.f32 0.0, %v1065
  %v1067 = vpop.f32.mrb[0].mxu0
  %1068 = vmatprep.mubr.f32.mxu0 0.0
  %1069 = vmatmul.mubr.f32.gmra.mrb[0].mxu0 %v952
  %v1070 = vpop.f32.mrb[0].mxu0
  %v1071 = vadd.f32 0.0, %v1070
  %v1072 = vpop.f32.mrb[0].mxu0
  %1073 = vmatprep.mubr.f32.mxu0 0.0
  %1074 = vmatmul.mubr.f32.gmra.mrb[0].mxu0 %v953
  %v1075 = vpop.f32.mrb[0].mxu0
  %v1076 = vadd.f32 0.0, %v1075
  %v1077 = vpop.f32.mrb[0].mxu0
  %1078 = vmatprep.mubr.f32.mxu0 0.0
  %1079 = vmatmul.mubr.f32.gmra.mrb[0].mxu0 %v954
  %v1080 = vpop.f32.mrb[0].mxu0
  %v1081 = vadd.f32 0.0, %v1080
  %v1082 = vpop.f32.mrb[0].mxu0
  %1083 = vmatprep.mubr.f32.mxu0 0.0
  %1084 = vmatmul.mubr.f32.gmra.mrb[0].mxu0 %v955
  %v1085 = vpop.f32.mrb[0].mxu0
  %v1086 = vadd.f32 0.0, %v1085
  %v1087 = vpop.f32.mrb[0].mxu0
  %1088 = vmatprep.mubr.f32.mxu0 0.0
  %1089 = vmatmul.mubr.f32.gmra.mrb[0].mxu0 %v956
  %v1090 = vpop.f32.mrb[0].mxu0
  %v1091 = vadd.f32 0.0, %v1090
  %v1092 = vpop.f32.mrb[0].mxu0
  %1093 = vmatprep.mubr.f32.mxu0 0.0
  %1094 = vmatmul.mubr.f32.gmra.mrb[0].mxu0 %v957
  %v1095 = vpop.f32.mrb[0].mxu0
  %v1096 = vadd.f32 0.0, %v1095
  %v1097 = vpop.f32.mrb[0].mxu0
  %1098 = vmatprep.mubr.f32.mxu0 0.0
  %1099 = vmatmul.mubr.f32.gmra.mrb[0].mxu0 %v958
  %v1100 = vpop.f32.mrb[0].mxu0
  %v1101 = vadd.f32 0.0, %v1100
  %v1102 = vpop.f32.mrb[0].mxu0
  %1103 = vmatprep.mubr.f32.mxu0 0.0
  %1104 = vmatmul.mubr.f32.gmra.mrb[0].mxu0 %v959
  %v1105 = vpop.f32.mrb[0].mxu0
  %v1106 = vadd.f32 0.0, %v1105
  %v1107 = vpop.f32.mrb[0].mxu0
  %1108 = vmatprep.mubr.f32.mxu0 0.0
  %1109 = vmatmul.mubr.f32.gmra.mrb[0].mxu0 %v960
  %v1110 = vpop.f32.mrb[0].mxu0
  %v1111 = vadd.f32 0.0, %v1110
  %v1112 = vpop.f32.mrb[0].mxu0
  %1113 = vmatprep.mubr.f32.mxu0 0.0
  %1114 = vmatmul.mubr.f32.gmra.mrb[0].mxu0 %v961
  %v1115 = vpop.f32.mrb[0].mxu0
  %v1116 = vadd.f32 0.0, %v1115
  %v1117 = vpop.f32.mrb[0].mxu0
  %1118 = vmatprep.mubr.f32.mxu0 0.0
  %1119 = vmatmul.mubr.f32.gmra.mrb[0].mxu0 %v962
  %v1120 = vpop.f32.mrb[0].mxu0
  %v1121 = vadd.f32 0.0, %v1120
  %v1122 = vpop.f32.mrb[0].mxu0
  %1123 = vmatprep.mubr.f32.mxu0 0.0
  %1124 = vmatmul.mubr.f32.gmra.mrb[0].mxu0 %v963
  %v1125 = vpop.f32.mrb[0].mxu0
  %v1126 = vadd.f32 0.0, %v1125
  %v1127 = vpop.f32.mrb[0].mxu0
  %1128 = vmatprep.mubr.f32.mxu0 0.0
  %1129 = vmatmul.mubr.f32.gmra.mrb[0].mxu0 %v964
  %v1130 = vpop.f32.mrb[0].mxu0
  %v1131 = vadd.f32 0.0, %v1130
  %v1132 = vpop.f32.mrb[0].mxu0
  %1133 = vmatprep.mubr.f32.mxu0 0.0
  %1134 = vmatmul.mubr.f32.gmra.mrb[0].mxu0 %v965
  %v1135 = vpop.f32.mrb[0].mxu0
  %v1136 = vadd.f32 0.0, %v1135
  %v1137 = vpop.f32.mrb[0].mxu0
  %1138 = vmatprep.mubr.f32.mxu0 0.0
  %1139 = vmatmul.mubr.f32.gmra.mrb[0].mxu0 %v966
  %v1140 = vpop.f32.mrb[0].mxu0
  %v1141 = vadd.f32 0.0, %v1140
  %v1142 = vpop.f32.mrb[0].mxu0
  %1143 = vmatprep.mubr.f32.mxu0 0.0
  %1144 = vmatmul.mubr.f32.gmra.mrb[0].mxu0 %v967
  %v1145 = vpop.f32.mrb[0].mxu0
  %v1146 = vadd.f32 0.0, %v1145
  %v1147 = vpop.f32.mrb[0].mxu0
  %1148 = vmatprep.mubr.f32.mxu0 0.0
  %1149 = vmatmul.mubr.f32.gmra.mrb[0].mxu0 %v968
  %v1150 = vpop.f32.mrb[0].mxu0
  %v1151 = vadd.f32 0.0, %v1150
  %v1152 = vpop.f32.mrb[0].mxu0
  %1153 = vmatprep.mubr.f32.mxu0 0.0
  %1154 = vmatmul.mubr.f32.gmra.mrb[0].mxu0 %v969
  %v1155 = vpop.f32.mrb[0].mxu0
  %v1156 = vadd.f32 0.0, %v1155
  %v1157 = vpop.f32.mrb[0].mxu0
  %1158 = vmatprep.mubr.f32.mxu0 0.0
  %1159 = vmatmul.mubr.f32.gmra.mrb[0].mxu0 %v970
  %v1160 = vpop.f32.mrb[0].mxu0
  %v1161 = vadd.f32 0.0, %v1160
  %v1162 = vpop.f32.mrb[0].mxu0
  %1163 = vmatprep.mubr.f32.mxu0 0.0
  %1164 = vmatmul.mubr.f32.gmra.mrb[0].mxu0 %v971
  %v1165 = vpop.f32.mrb[0].mxu0
  %v1166 = vadd.f32 0.0, %v1165
  %v1167 = vpop.f32.mrb[0].mxu0
  %1168 = vmatprep.mubr.f32.mxu0 0.0
  %1169 = vmatmul.mubr.f32.gmra.mrb[0].mxu0 %v972
  %v1170 = vpop.f32.mrb[0].mxu0
  %v1171 = vadd.f32 0.0, %v1170
  %v1172 = vpop.f32.mrb[0].mxu0
  %1173 = vmatprep.mubr.f32.mxu0 0.0
  %1174 = vmatmul.mubr.f32.gmra.mrb[0].mxu0 %v973
  %v1175 = vpop.f32.mrb[0].mxu0
  %v1176 = vadd.f32 0.0, %v1175
  %v1177 = vpop.f32.mrb[0].mxu0
  %1178 = vmatprep.mubr.f32.mxu0 0.0
  %1179 = vmatmul.mubr.f32.gmra.mrb[0].mxu0 %v974
  %v1180 = vpop.f32.mrb[0].mxu0
  %v1181 = vadd.f32 0.0, %v1180
  %v1182 = vpop.f32.mrb[0].mxu0
  %1183 = vmatprep.mubr.f32.mxu0 0.0
  %1184 = vmatmul.mubr.f32.gmra.mrb[0].mxu0 %v975
  %v1185 = vpop.f32.mrb[0].mxu0
  %v1186 = vadd.f32 0.0, %v1185
  %v1187 = vpop.f32.mrb[0].mxu0
  %1188 = vmatprep.mubr.f32.mxu0 0.0
  %1189 = vmatmul.mubr.f32.gmra.mrb[0].mxu0 %v976
  %v1190 = vpop.f32.mrb[0].mxu0
  %v1191 = vadd.f32 0.0, %v1190
  %v1192 = vpop.f32.mrb[0].mxu0
  %1193 = vmatprep.mubr.f32.mxu0 0.0
  %1194 = vmatmul.mubr.f32.gmra.mrb[0].mxu0 %v977
  %v1195 = vpop.f32.mrb[0].mxu0
  %v1196 = vadd.f32 0.0, %v1195
  %v1197 = vpop.f32.mrb[0].mxu0
  %1198 = vmatprep.mubr.f32.mxu0 0.0
  %1199 = vmatmul.mubr.f32.gmra.mrb[0].mxu0 %v978
  %v1200 = vpop.f32.mrb[0].mxu0
  %v1201 = vadd.f32 0.0, %v1200
  %v1202 = vpop.f32.mrb[0].mxu0
  %1203 = vmatprep.mubr.f32.mxu0 0.0
  %1204 = vmatmul.mubr.f32.gmra.mrb[0].mxu0 %v979
  %v1205 = vpop.f32.mrb[0].mxu0
  %v1206 = vadd.f32 0.0, %v1205
  %v1207 = vpop.f32.mrb[0].mxu0
  %1208 = vmatprep.mubr.f32.mxu0 0.0
  %1209 = vmatmul.mubr.f32.gmra.mrb[0].mxu0 %v980
  %v1210 = vpop.f32.mrb[0].mxu0
  %v1211 = vadd.f32 0.0, %v1210
  %v1212 = vpop.f32.mrb[0].mxu0
  %1213 = vmatprep.mubr.f32.mxu0 0.0
  %1214 = vmatmul.mubr.f32.gmra.mrb[0].mxu0 %v981
  %v1215 = vpop.f32.mrb[0].mxu0
  %v1216 = vadd.f32 0.0, %v1215
  %v1217 = vpop.f32.mrb[0].mxu0
  %1218 = vmatprep.mubr.f32.mxu0 0.0
  %1219 = vmatmul.mubr.f32.gmra.mrb[0].mxu0 %v982
  %v1220 = vpop.f32.mrb[0].mxu0
  %v1221 = vadd.f32 0.0, %v1220
  %v1222 = vpop.f32.mrb[0].mxu0
  %1223 = vmatprep.mubr.f32.mxu0 0.0
  %1224 = vmatmul.mubr.f32.gmra.mrb[0].mxu0 %v983
  %v1225 = vpop.f32.mrb[0].mxu0
  %v1226 = vadd.f32 0.0, %v1225
  %v1227 = vpop.f32.mrb[0].mxu0
  %1228 = vdwg.mxu0
  %v1229 = vmax.f32 %v911, %v1051
  %v1230 = vmax.f32 %v912, %v1056
  %v1231 = vmax.f32 %v913, %v1061
  %v1232 = vmax.f32 %v914, %v1066
  %v1233 = vmax.f32 %v915, %v1071
  %v1234 = vmax.f32 %v916, %v1076
  %v1235 = vmax.f32 %v917, %v1081
  %v1236 = vmax.f32 %v918, %v1086
  %v1237 = vmax.f32 %v919, %v1091
  %v1238 = vmax.f32 %v920, %v1096
  %v1239 = vmax.f32 %v921, %v1101
  %v1240 = vmax.f32 %v922, %v1106
  %v1241 = vmax.f32 %v923, %v1111
  %v1242 = vmax.f32 %v924, %v1116
  %v1243 = vmax.f32 %v925, %v1121
  %v1244 = vmax.f32 %v926, %v1126
  %v1245 = vmax.f32 %v927, %v1131
  %v1246 = vmax.f32 %v928, %v1136
  %v1247 = vmax.f32 %v929, %v1141
  %v1248 = vmax.f32 %v930, %v1146
  %v1249 = vmax.f32 %v931, %v1151
  %v1250 = vmax.f32 %v932, %v1156
  %v1251 = vmax.f32 %v933, %v1161
  %v1252 = vmax.f32 %v934, %v1166
  %v1253 = vmax.f32 %v935, %v1171
  %v1254 = vmax.f32 %v936, %v1176
  %v1255 = vmax.f32 %v937, %v1181
  %v1256 = vmax.f32 %v938, %v1186
  %v1257 = vmax.f32 %v939, %v1191
  %v1258 = vmax.f32 %v940, %v1196
  %v1259 = vmax.f32 %v941, %v1201
  %v1260 = vmax.f32 %v942, %v1206
  %v1261 = vmax.f32 %v943, %v1211
  %v1262 = vmax.f32 %v944, %v1216
  %v1263 = vmax.f32 %v945, %v1221
  %v1264 = vmax.f32 %v946, %v1226
  %v1265 = vld [vmem:[%s2] sm:$0x1]
  %v1267 = vlaneseq
  %v1268 = vshrl.u32 %v1267, 7
  %v1269 = vsub.s32 0, %v1268
  %v1270 = vrot.slane %v1265, %v1269
  %v1272 = vadd.f32 %v1229, %v1270
  %v1273 = vadd.f32 %v1230, %v1270
  %v1274 = vadd.f32 %v1231, %v1270
  %v1275 = vadd.f32 %v1232, %v1270
  %v1276 = vadd.f32 %v1233, %v1270
  %v1277 = vadd.f32 %v1234, %v1270
  %v1278 = vadd.f32 %v1235, %v1270
  %v1279 = vadd.f32 %v1236, %v1270
  %v1280 = vadd.f32 %v1237, %v1270
  %v1281 = vadd.f32 %v1238, %v1270
  %v1282 = vadd.f32 %v1239, %v1270
  %v1283 = vadd.f32 %v1240, %v1270
  %v1284 = vadd.f32 %v1241, %v1270
  %v1285 = vadd.f32 %v1242, %v1270
  %v1286 = vadd.f32 %v1243, %v1270
  %v1287 = vadd.f32 %v1244, %v1270
  %v1288 = vadd.f32 %v1245, %v1270
  %v1289 = vadd.f32 %v1246, %v1270
  %v1290 = vadd.f32 %v1247, %v1270
  %v1291 = vadd.f32 %v1248, %v1270
  %v1292 = vadd.f32 %v1249, %v1270
  %v1293 = vadd.f32 %v1250, %v1270
  %v1294 = vadd.f32 %v1251, %v1270
  %v1295 = vadd.f32 %v1252, %v1270
  %v1296 = vadd.f32 %v1253, %v1270
  %v1297 = vadd.f32 %v1254, %v1270
  %v1298 = vadd.f32 %v1255, %v1270
  %v1299 = vadd.f32 %v1256, %v1270
  %v1300 = vadd.f32 %v1257, %v1270
  %v1301 = vadd.f32 %v1258, %v1270
  %v1302 = vadd.f32 %v1259, %v1270
  %v1303 = vadd.f32 %v1260, %v1270
  %v1304 = vadd.f32 %v1261, %v1270
  %v1305 = vadd.f32 %v1262, %v1270
  %v1306 = vadd.f32 %v1263, %v1270
  %v1307 = vadd.f32 %v1264, %v1270
  %v1308 = vmax.f32 %v1272, 0.0
  %v1309 = vmax.f32 %v1273, 0.0
  %v1310 = vmax.f32 %v1274, 0.0
  %v1311 = vmax.f32 %v1275, 0.0
  %v1312 = vmax.f32 %v1276, 0.0
  %v1313 = vmax.f32 %v1277, 0.0
  %v1314 = vmax.f32 %v1278, 0.0
  %v1315 = vmax.f32 %v1279, 0.0
  %v1316 = vmax.f32 %v1280, 0.0
  %v1317 = vmax.f32 %v1281, 0.0
  %v1318 = vmax.f32 %v1282, 0.0
  %v1319 = vmax.f32 %v1283, 0.0
  %v1320 = vmax.f32 %v1284, 0.0
  %v1321 = vmax.f32 %v1285, 0.0
  %v1322 = vmax.f32 %v1286, 0.0
  %v1323 = vmax.f32 %v1287, 0.0
  %v1324 = vmax.f32 %v1288, 0.0
  %v1325 = vmax.f32 %v1289, 0.0
  %v1326 = vmax.f32 %v1290, 0.0
  %v1327 = vmax.f32 %v1291, 0.0
  %v1328 = vmax.f32 %v1292, 0.0
  %v1329 = vmax.f32 %v1293, 0.0
  %v1330 = vmax.f32 %v1294, 0.0
  %v1331 = vmax.f32 %v1295, 0.0
  %v1332 = vmax.f32 %v1296, 0.0
  %v1333 = vmax.f32 %v1297, 0.0
  %v1334 = vmax.f32 %v1298, 0.0
  %v1335 = vmax.f32 %v1299, 0.0
  %v1336 = vmax.f32 %v1300, 0.0
  %v1337 = vmax.f32 %v1301, 0.0
  %v1338 = vmax.f32 %v1302, 0.0
  %v1339 = vmax.f32 %v1303, 0.0
  %v1340 = vmax.f32 %v1304, 0.0
  %v1341 = vmax.f32 %v1305, 0.0
  %v1342 = vmax.f32 %v1306, 0.0
  %v1343 = vmax.f32 %v1307, 0.0
  %1344 = vst [vmem:[%s3] sm:$0xff] %v1308
  %1345 = vst [vmem:[%s3 + $0x8] sm:$0xff] %v1309
  %1346 = vst [vmem:[%s3 + $0x10] sm:$0xff] %v1310
  %1347 = vst [vmem:[%s3 + $0x18] sm:$0xff] %v1311
  %1348 = vst [vmem:[%s3 + $0x20] sm:$0xff] %v1312
  %1349 = vst [vmem:[%s3 + $0x28] sm:$0xff] %v1313
  %1350 = vst [vmem:[%s3 + $0x30] sm:$0xff] %v1314
  %1351 = vst [vmem:[%s3 + $0x38] sm:$0xff] %v1315
  %1352 = vst [vmem:[%s3 + $0x40] sm:$0xff] %v1316
  %1353 = vst [vmem:[%s3 + $0x48] sm:$0xff] %v1317
  %1354 = vst [vmem:[%s3 + $0x50] sm:$0xff] %v1318
  %1355 = vst [vmem:[%s3 + $0x58] sm:$0xff] %v1319
  %1356 = vst [vmem:[%s3 + $0x60] sm:$0xff] %v1320
  %1357 = vst [vmem:[%s3 + $0x68] sm:$0xff] %v1321
  %1358 = vst [vmem:[%s3 + $0x70] sm:$0xff] %v1322
  %1359 = vst [vmem:[%s3 + $0x78] sm:$0xff] %v1323
  %1360 = vst [vmem:[%s3 + $0x80] sm:$0xff] %v1324
  %1361 = vst [vmem:[%s3 + $0x88] sm:$0xff] %v1325
  %1362 = vst [vmem:[%s3 + $0x90] sm:$0xff] %v1326
  %1363 = vst [vmem:[%s3 + $0x98] sm:$0xff] %v1327
  %1364 = vst [vmem:[%s3 + $0xa0] sm:$0xff] %v1328
  %1365 = vst [vmem:[%s3 + $0xa8] sm:$0xff] %v1329
  %1366 = vst [vmem:[%s3 + $0xb0] sm:$0xff] %v1330
  %1367 = vst [vmem:[%s3 + $0xb8] sm:$0xff] %v1331
  %1368 = vst [vmem:[%s3 + $0xc0] sm:$0xff] %v1332
  %1369 = vst [vmem:[%s3 + $0xc8] sm:$0xff] %v1333
  %1370 = vst [vmem:[%s3 + $0xd0] sm:$0xff] %v1334
  %1371 = vst [vmem:[%s3 + $0xd8] sm:$0xff] %v1335
  %1372 = vst [vmem:[%s3 + $0xe0] sm:$0xff] %v1336
  %1373 = vst [vmem:[%s3 + $0xe8] sm:$0xff] %v1337
  %1374 = vst [vmem:[%s3 + $0xf0] sm:$0xff] %v1338
  %1375 = vst [vmem:[%s3 + $0xf8] sm:$0xff] %v1339
  %1376 = vst [vmem:[%s3 + $0x100] sm:$0xff] %v1340
  %1377 = vst [vmem:[%s3 + $0x108] sm:$0xff] %v1341
  %1378 = vst [vmem:[%s3 + $0x110] sm:$0xff] %v1342
  %1379 = vst [vmem:[%s3 + $0x118] sm:$0xff] %v1343
  // Predicated region
  $region14: #{network_forward.3} parent=0 // pred_check
    _
  $region15: #{network_forward.3} parent=0 // pred_check_branch
    %1381 = sbr.rel (0) target = $region17
  $region16: #{network_forward.3} parent=0 // pred_region
    _
  $region17: #{network_forward.3} parent=0 // pred_fallthru
    _
  // Predicated region
  $region18: #{network_forward.3} parent=0 // pred_check
    _
  $region19: #{network_forward.3} parent=0 // pred_check_branch
    %1383 = sbr.rel (0) target = $region21
  $region20: #{network_forward.3} parent=0 // pred_region
    _
  $region21: #{network_forward.3} parent=0 // pred_fallthru
    _

// kernel: network_forward.4
$region0: #{network_forward.4}
  #allocation0 [shape = 'u32[]', space=smem, size = 0x4, offset = 0x4, fixed_abs, tag = 'smem constant byte address 0x4 - core index']
  #allocation1 [shape = 'u32[144,128]{1,0:T(1,128)}', space=vmem, size = 0x12000, scoped, tag = 'internal scratch']
  %s0 = inlined_call_operand.vmem [shape: f32[4,32,256], index: 0, kind: input, shape index: {}]
  %s1 = inlined_call_operand.vmem [shape: f32[256,128], index: 1, kind: input, shape index: {}]
  %s2 = inlined_call_operand.vmem [shape: f32[1,128], index: 2, kind: input, shape index: {}]
  %s3 = inlined_call_operand.vmem [shape: f32[32,128], index: 3, kind: output, shape index: {}]
  %s4 = sld [smem:[#allocation0]]
  $region22: #{network_forward.4} parent=0
    _
  %s6 = ssub.s32 1, %s4
  %s7 = scalar_select 0, %s6, %s4
  // Predicated region
  $region2: #{network_forward.4} parent=0 // pred_check
    _
  $region3: #{network_forward.4} parent=0 // pred_check_branch
    %9 = sbr.rel (0) target = $region5
  $region4: #{network_forward.4} parent=0 // pred_region
    _
  $region5: #{network_forward.4} parent=0 // pred_fallthru
    _
  // Predicated region
  $region6: #{network_forward.4} parent=0 // pred_check
    _
  $region7: #{network_forward.4} parent=0 // pred_check_branch
    %11 = sbr.rel (0) target = $region9
  $region8: #{network_forward.4} parent=0 // pred_region
    _
  $region9: #{network_forward.4} parent=0 // pred_fallthru
    _
  // Predicated region
  $region10: #{network_forward.4} parent=0 // pred_check
    _
  $region11: #{network_forward.4} parent=0 // pred_check_branch
    %13 = sbr.rel (0) target = $region13
  $region12: #{network_forward.4} parent=0 // pred_region
    _
  $region13: #{network_forward.4} parent=0 // pred_fallthru
    _
  %v14 = vld [vmem:[%s1] sm:$0xff]
  %v15 = vld [vmem:[%s1 + $0x8] sm:$0xff]
  %v16 = vld [vmem:[%s1 + $0x10] sm:$0xff]
  %v17 = vld [vmem:[%s1 + $0x18] sm:$0xff]
  %v18 = vld [vmem:[%s1 + $0x20] sm:$0xff]
  %v19 = vld [vmem:[%s1 + $0x28] sm:$0xff]
  %v20 = vld [vmem:[%s1 + $0x30] sm:$0xff]
  %v21 = vld [vmem:[%s1 + $0x38] sm:$0xff]
  %v22 = vld [vmem:[%s1 + $0x40] sm:$0xff]
  %v23 = vld [vmem:[%s1 + $0x48] sm:$0xff]
  %v24 = vld [vmem:[%s1 + $0x50] sm:$0xff]
  %v25 = vld [vmem:[%s1 + $0x58] sm:$0xff]
  %v26 = vld [vmem:[%s1 + $0x60] sm:$0xff]
  %v27 = vld [vmem:[%s1 + $0x68] sm:$0xff]
  %v28 = vld [vmem:[%s1 + $0x70] sm:$0xff]
  %v29 = vld [vmem:[%s1 + $0x78] sm:$0xff]
  %v30 = vld [vmem:[%s1 + $0x80] sm:$0xff]
  %v31 = vld [vmem:[%s1 + $0x88] sm:$0xff]
  %v32 = vld [vmem:[%s1 + $0x90] sm:$0xff]
  %v33 = vld [vmem:[%s1 + $0x98] sm:$0xff]
  %v34 = vld [vmem:[%s1 + $0xa0] sm:$0xff]
  %v35 = vld [vmem:[%s1 + $0xa8] sm:$0xff]
  %v36 = vld [vmem:[%s1 + $0xb0] sm:$0xff]
  %v37 = vld [vmem:[%s1 + $0xb8] sm:$0xff]
  %v38 = vld [vmem:[%s1 + $0xc0] sm:$0xff]
  %v39 = vld [vmem:[%s1 + $0xc8] sm:$0xff]
  %v40 = vld [vmem:[%s1 + $0xd0] sm:$0xff]
  %v41 = vld [vmem:[%s1 + $0xd8] sm:$0xff]
  %v42 = vld [vmem:[%s1 + $0xe0] sm:$0xff]
  %v43 = vld [vmem:[%s1 + $0xe8] sm:$0xff]
  %v44 = vld [vmem:[%s1 + $0xf0] sm:$0xff]
  %v45 = vld [vmem:[%s1 + $0xf8] sm:$0xff]
  %v46 = vld [vmem:[%s0] sm:$0xff]
  %v47 = vld [vmem:[%s0 + $0x8] sm:$0xff]
  %v48 = vld [vmem:[%s0 + $0x10] sm:$0xff]
  %v49 = vld [vmem:[%s0 + $0x18] sm:$0xff]
  %v50 = vld [vmem:[%s0 + $0x20] sm:$0xff]
  %v51 = vld [vmem:[%s0 + $0x28] sm:$0xff]
  %v52 = vld [vmem:[%s0 + $0x30] sm:$0xff]
  %v53 = vld [vmem:[%s0 + $0x38] sm:$0xff]
  %54 = vmatprep.subr.mxu0 0.0
  %55 = vmatpush1.msra.mxu0 %v14
  %56 = vmatprep.subr.mxu0 0.0
  %57 = vmatpush1.msra.mxu0 %v15
  %58 = vmatprep.subr.mxu0 0.0
  %59 = vmatpush1.msra.mxu0 %v16
  %60 = vmatprep.subr.mxu0 0.0
  %61 = vmatpush1.msra.mxu0 %v17
  %62 = vmatprep.subr.mxu0 0.0
  %63 = vmatpush1.msra.mxu0 %v18
  %64 = vmatprep.subr.mxu0 0.0
  %65 = vmatpush1.msra.mxu0 %v19
  %66 = vmatprep.subr.mxu0 0.0
  %67 = vmatpush1.msra.mxu0 %v20
  %68 = vmatprep.subr.mxu0 0.0
  %69 = vmatpush1.msra.mxu0 %v21
  %70 = vmatprep.subr.mxu0 0.0
  %71 = vmatpush1.msra.mxu0 %v22
  %72 = vmatprep.subr.mxu0 0.0
  %73 = vmatpush1.msra.mxu0 %v23
  %74 = vmatprep.subr.mxu0 0.0
  %75 = vmatpush1.msra.mxu0 %v24
  %76 = vmatprep.subr.mxu0 0.0
  %77 = vmatpush1.msra.mxu0 %v25
  %78 = vmatprep.subr.mxu0 0.0
  %79 = vmatpush1.msra.mxu0 %v26
  %80 = vmatprep.subr.mxu0 0.0
  %81 = vmatpush1.msra.mxu0 %v27
  %82 = vmatprep.subr.mxu0 0.0
  %83 = vmatpush1.msra.mxu0 %v28
  %84 = vmatprep.subr.mxu0 0.0
  %85 = vmatpush1.msra.mxu0 %v29
  %86 = vmatprep.subr.mxu0 0.0
  %87 = vmatpush1.msra.mxu0 %v30
  %88 = vmatprep.subr.mxu0 0.0
  %89 = vmatpush1.msra.mxu0 %v31
  %90 = vmatprep.subr.mxu0 0.0
  %91 = vmatpush1.msra.mxu0 %v32
  %92 = vmatprep.subr.mxu0 0.0
  %93 = vmatpush1.msra.mxu0 %v33
  %94 = vmatprep.subr.mxu0 0.0
  %95 = vmatpush1.msra.mxu0 %v34
  %96 = vmatprep.subr.mxu0 0.0
  %97 = vmatpush1.msra.mxu0 %v35
  %98 = vmatprep.subr.mxu0 0.0
  %99 = vmatpush1.msra.mxu0 %v36
  %100 = vmatprep.subr.mxu0 0.0
  %101 = vmatpush1.msra.mxu0 %v37
  %102 = vmatprep.subr.mxu0 0.0
  %103 = vmatpush1.msra.mxu0 %v38
  %104 = vmatprep.subr.mxu0 0.0
  %105 = vmatpush1.msra.mxu0 %v39
  %106 = vmatprep.subr.mxu0 0.0
  %107 = vmatpush1.msra.mxu0 %v40
  %108 = vmatprep.subr.mxu0 0.0
  %109 = vmatpush1.msra.mxu0 %v41
  %110 = vmatprep.subr.mxu0 0.0
  %111 = vmatpush1.msra.mxu0 %v42
  %112 = vmatprep.subr.mxu0 0.0
  %113 = vmatpush1.msra.mxu0 %v43
  %114 = vmatprep.subr.mxu0 0.0
  %115 = vmatpush1.msra.mxu0 %v44
  %116 = vmatprep.subr.mxu0 0.0
  %117 = vmatpush1.msra.mxu0 %v45
  %118 = vmatprep.mubr.f32.mxu0 %v47
  %119 = vmatmul.mubr.f32.gmra.mrb[0].mxu0 %v46
  %v120 = vpop.f32.mrb[0].mxu0
  %v121 = vadd.f32 0.0, %v120
  %v122 = vpop.f32.mrb[0].mxu0
  %123 = vmatprep.mubr.f32.mxu0 %v49
  %124 = vmatmul.mubr.f32.gmra.mrb[0].mxu0 %v48
  %v125 = vpop.f32.mrb[0].mxu0
  %v126 = vadd.f32 0.0, %v125
  %v127 = vpop.f32.mrb[0].mxu0
  %128 = vmatprep.mubr.f32.mxu0 %v51
  %129 = vmatmul.mubr.f32.gmra.mrb[0].mxu0 %v50
  %v130 = vpop.f32.mrb[0].mxu0
  %v131 = vadd.f32 0.0, %v130
  %v132 = vpop.f32.mrb[0].mxu0
  %133 = vmatprep.mubr.f32.mxu0 %v53
  %134 = vmatmul.mubr.f32.gmra.mrb[0].mxu0 %v52
  %v135 = vpop.f32.mrb[0].mxu0
  %v136 = vadd.f32 0.0, %v135
  %v137 = vpop.f32.mrb[0].mxu0
  %138 = vdwg.mxu0
  %s139 = scalar_lea.vmem %s0, 64
  %v140 = vld [vmem:[%s139] sm:$0xff]
  %v141 = vld [vmem:[%s139 + $0x8] sm:$0xff]
  %v142 = vld [vmem:[%s139 + $0x10] sm:$0xff]
  %v143 = vld [vmem:[%s139 + $0x18] sm:$0xff]
  %v144 = vld [vmem:[%s139 + $0x20] sm:$0xff]
  %v145 = vld [vmem:[%s139 + $0x28] sm:$0xff]
  %v146 = vld [vmem:[%s139 + $0x30] sm:$0xff]
  %v147 = vld [vmem:[%s139 + $0x38] sm:$0xff]
  %148 = vmatprep.subr.mxu0 0.0
  %149 = vmatpush1.msra.mxu0 %v14
  %150 = vmatprep.subr.mxu0 0.0
  %151 = vmatpush1.msra.mxu0 %v15
  %152 = vmatprep.subr.mxu0 0.0
  %153 = vmatpush1.msra.mxu0 %v16
  %154 = vmatprep.subr.mxu0 0.0
  %155 = vmatpush1.msra.mxu0 %v17
  %156 = vmatprep.subr.mxu0 0.0
  %157 = vmatpush1.msra.mxu0 %v18
  %158 = vmatprep.subr.mxu0 0.0
  %159 = vmatpush1.msra.mxu0 %v19
  %160 = vmatprep.subr.mxu0 0.0
  %161 = vmatpush1.msra.mxu0 %v20
  %162 = vmatprep.subr.mxu0 0.0
  %163 = vmatpush1.msra.mxu0 %v21
  %164 = vmatprep.subr.mxu0 0.0
  %165 = vmatpush1.msra.mxu0 %v22
  %166 = vmatprep.subr.mxu0 0.0
  %167 = vmatpush1.msra.mxu0 %v23
  %168 = vmatprep.subr.mxu0 0.0
  %169 = vmatpush1.msra.mxu0 %v24
  %170 = vmatprep.subr.mxu0 0.0
  %171 = vmatpush1.msra.mxu0 %v25
  %172 = vmatprep.subr.mxu0 0.0
  %173 = vmatpush1.msra.mxu0 %v26
  %174 = vmatprep.subr.mxu0 0.0
  %175 = vmatpush1.msra.mxu0 %v27
  %176 = vmatprep.subr.mxu0 0.0
  %177 = vmatpush1.msra.mxu0 %v28
  %178 = vmatprep.subr.mxu0 0.0
  %179 = vmatpush1.msra.mxu0 %v29
  %180 = vmatprep.subr.mxu0 0.0
  %181 = vmatpush1.msra.mxu0 %v30
  %182 = vmatprep.subr.mxu0 0.0
  %183 = vmatpush1.msra.mxu0 %v31
  %184 = vmatprep.subr.mxu0 0.0
  %185 = vmatpush1.msra.mxu0 %v32
  %186 = vmatprep.subr.mxu0 0.0
  %187 = vmatpush1.msra.mxu0 %v33
  %188 = vmatprep.subr.mxu0 0.0
  %189 = vmatpush1.msra.mxu0 %v34
  %190 = vmatprep.subr.mxu0 0.0
  %191 = vmatpush1.msra.mxu0 %v35
  %192 = vmatprep.subr.mxu0 0.0
  %193 = vmatpush1.msra.mxu0 %v36
  %194 = vmatprep.subr.mxu0 0.0
  %195 = vmatpush1.msra.mxu0 %v37
  %196 = vmatprep.subr.mxu0 0.0
  %197 = vmatpush1.msra.mxu0 %v38
  %198 = vmatprep.subr.mxu0 0.0
  %199 = vmatpush1.msra.mxu0 %v39
  %200 = vmatprep.subr.mxu0 0.0
  %201 = vmatpush1.msra.mxu0 %v40
  %202 = vmatprep.subr.mxu0 0.0
  %203 = vmatpush1.msra.mxu0 %v41
  %204 = vmatprep.subr.mxu0 0.0
  %205 = vmatpush1.msra.mxu0 %v42
  %206 = vmatprep.subr.mxu0 0.0
  %207 = vmatpush1.msra.mxu0 %v43
  %208 = vmatprep.subr.mxu0 0.0
  %209 = vmatpush1.msra.mxu0 %v44
  %210 = vmatprep.subr.mxu0 0.0
  %211 = vmatpush1.msra.mxu0 %v45
  %212 = vmatprep.mubr.f32.mxu0 %v141
  %213 = vmatmul.mubr.f32.gmra.mrb[0].mxu0 %v140
  %v214 = vpop.f32.mrb[0].mxu0
  %v215 = vadd.f32 0.0, %v214
  %v216 = vpop.f32.mrb[0].mxu0
  %217 = vmatprep.mubr.f32.mxu0 %v143
  %218 = vmatmul.mubr.f32.gmra.mrb[0].mxu0 %v142
  %v219 = vpop.f32.mrb[0].mxu0
  %v220 = vadd.f32 0.0, %v219
  %v221 = vpop.f32.mrb[0].mxu0
  %222 = vmatprep.mubr.f32.mxu0 %v145
  %223 = vmatmul.mubr.f32.gmra.mrb[0].mxu0 %v144
  %v224 = vpop.f32.mrb[0].mxu0
  %v225 = vadd.f32 0.0, %v224
  %v226 = vpop.f32.mrb[0].mxu0
  %227 = vmatprep.mubr.f32.mxu0 %v147
  %228 = vmatmul.mubr.f32.gmra.mrb[0].mxu0 %v146
  %v229 = vpop.f32.mrb[0].mxu0
  %v230 = vadd.f32 0.0, %v229
  %v231 = vpop.f32.mrb[0].mxu0
  %232 = vdwg.mxu0
  %v233 = vmax.f32 %v121, %v215
  %v234 = vmax.f32 %v126, %v220
  %v235 = vmax.f32 %v131, %v225
  %v236 = vmax.f32 %v136, %v230
  %s237 = scalar_lea.vmem %s0, 128
  %v238 = vld [vmem:[%s237] sm:$0xff]
  %v239 = vld [vmem:[%s237 + $0x8] sm:$0xff]
  %v240 = vld [vmem:[%s237 + $0x10] sm:$0xff]
  %v241 = vld [vmem:[%s237 + $0x18] sm:$0xff]
  %v242 = vld [vmem:[%s237 + $0x20] sm:$0xff]
  %v243 = vld [vmem:[%s237 + $0x28] sm:$0xff]
  %v244 = vld [vmem:[%s237 + $0x30] sm:$0xff]
  %v245 = vld [vmem:[%s237 + $0x38] sm:$0xff]
  %246 = vmatprep.subr.mxu0 0.0
  %247 = vmatpush1.msra.mxu0 %v14
  %248 = vmatprep.subr.mxu0 0.0
  %249 = vmatpush1.msra.mxu0 %v15
  %250 = vmatprep.subr.mxu0 0.0
  %251 = vmatpush1.msra.mxu0 %v16
  %252 = vmatprep.subr.mxu0 0.0
  %253 = vmatpush1.msra.mxu0 %v17
  %254 = vmatprep.subr.mxu0 0.0
  %255 = vmatpush1.msra.mxu0 %v18
  %256 = vmatprep.subr.mxu0 0.0
  %257 = vmatpush1.msra.mxu0 %v19
  %258 = vmatprep.subr.mxu0 0.0
  %259 = vmatpush1.msra.mxu0 %v20
  %260 = vmatprep.subr.mxu0 0.0
  %261 = vmatpush1.msra.mxu0 %v21
  %262 = vmatprep.subr.mxu0 0.0
  %263 = vmatpush1.msra.mxu0 %v22
  %264 = vmatprep.subr.mxu0 0.0
  %265 = vmatpush1.msra.mxu0 %v23
  %266 = vmatprep.subr.mxu0 0.0
  %267 = vmatpush1.msra.mxu0 %v24
  %268 = vmatprep.subr.mxu0 0.0
  %269 = vmatpush1.msra.mxu0 %v25
  %270 = vmatprep.subr.mxu0 0.0
  %271 = vmatpush1.msra.mxu0 %v26
  %272 = vmatprep.subr.mxu0 0.0
  %273 = vmatpush1.msra.mxu0 %v27
  %274 = vmatprep.subr.mxu0 0.0
  %275 = vmatpush1.msra.mxu0 %v28
  %276 = vmatprep.subr.mxu0 0.0
  %277 = vmatpush1.msra.mxu0 %v29
  %278 = vmatprep.subr.mxu0 0.0
  %279 = vmatpush1.msra.mxu0 %v30
  %280 = vmatprep.subr.mxu0 0.0
  %281 = vmatpush1.msra.mxu0 %v31
  %282 = vmatprep.subr.mxu0 0.0
  %283 = vmatpush1.msra.mxu0 %v32
  %284 = vmatprep.subr.mxu0 0.0
  %285 = vmatpush1.msra.mxu0 %v33
  %286 = vmatprep.subr.mxu0 0.0
  %287 = vmatpush1.msra.mxu0 %v34
  %288 = vmatprep.subr.mxu0 0.0
  %289 = vmatpush1.msra.mxu0 %v35
  %290 = vmatprep.subr.mxu0 0.0
  %291 = vmatpush1.msra.mxu0 %v36
  %292 = vmatprep.subr.mxu0 0.0
  %293 = vmatpush1.msra.mxu0 %v37
  %294 = vmatprep.subr.mxu0 0.0
  %295 = vmatpush1.msra.mxu0 %v38
  %296 = vmatprep.subr.mxu0 0.0
  %297 = vmatpush1.msra.mxu0 %v39
  %298 = vmatprep.subr.mxu0 0.0
  %299 = vmatpush1.msra.mxu0 %v40
  %300 = vmatprep.subr.mxu0 0.0
  %301 = vmatpush1.msra.mxu0 %v41
  %302 = vmatprep.subr.mxu0 0.0
  %303 = vmatpush1.msra.mxu0 %v42
  %304 = vmatprep.subr.mxu0 0.0
  %305 = vmatpush1.msra.mxu0 %v43
  %306 = vmatprep.subr.mxu0 0.0
  %307 = vmatpush1.msra.mxu0 %v44
  %308 = vmatprep.subr.mxu0 0.0
  %309 = vmatpush1.msra.mxu0 %v45
  %310 = vmatprep.mubr.f32.mxu0 %v239
  %311 = vmatmul.mubr.f32.gmra.mrb[0].mxu0 %v238
  %v312 = vpop.f32.mrb[0].mxu0
  %v313 = vadd.f32 0.0, %v312
  %v314 = vpop.f32.mrb[0].mxu0
  %315 = vmatprep.mubr.f32.mxu0 %v241
  %316 = vmatmul.mubr.f32.gmra.mrb[0].mxu0 %v240
  %v317 = vpop.f32.mrb[0].mxu0
  %v318 = vadd.f32 0.0, %v317
  %v319 = vpop.f32.mrb[0].mxu0
  %320 = vmatprep.mubr.f32.mxu0 %v243
  %321 = vmatmul.mubr.f32.gmra.mrb[0].mxu0 %v242
  %v322 = vpop.f32.mrb[0].mxu0
  %v323 = vadd.f32 0.0, %v322
  %v324 = vpop.f32.mrb[0].mxu0
  %325 = vmatprep.mubr.f32.mxu0 %v245
  %326 = vmatmul.mubr.f32.gmra.mrb[0].mxu0 %v244
  %v327 = vpop.f32.mrb[0].mxu0
  %v328 = vadd.f32 0.0, %v327
  %v329 = vpop.f32.mrb[0].mxu0
  %330 = vdwg.mxu0
  %v331 = vmax.f32 %v233, %v313
  %v332 = vmax.f32 %v234, %v318
  %v333 = vmax.f32 %v235, %v323
  %v334 = vmax.f32 %v236, %v328
  %s335 = scalar_lea.vmem %s0, 192
  %v336 = vld [vmem:[%s335] sm:$0xff]
  %v337 = vld [vmem:[%s335 + $0x8] sm:$0xff]
  %v338 = vld [vmem:[%s335 + $0x10] sm:$0xff]
  %v339 = vld [vmem:[%s335 + $0x18] sm:$0xff]
  %v340 = vld [vmem:[%s335 + $0x20] sm:$0xff]
  %v341 = vld [vmem:[%s335 + $0x28] sm:$0xff]
  %v342 = vld [vmem:[%s335 + $0x30] sm:$0xff]
  %v343 = vld [vmem:[%s335 + $0x38] sm:$0xff]
  %344 = vmatprep.subr.mxu0 0.0
  %345 = vmatpush1.msra.mxu0 %v14
  %346 = vmatprep.subr.mxu0 0.0
  %347 = vmatpush1.msra.mxu0 %v15
  %348 = vmatprep.subr.mxu0 0.0
  %349 = vmatpush1.msra.mxu0 %v16
  %350 = vmatprep.subr.mxu0 0.0
  %351 = vmatpush1.msra.mxu0 %v17
  %352 = vmatprep.subr.mxu0 0.0
  %353 = vmatpush1.msra.mxu0 %v18
  %354 = vmatprep.subr.mxu0 0.0
  %355 = vmatpush1.msra.mxu0 %v19
  %356 = vmatprep.subr.mxu0 0.0
  %357 = vmatpush1.msra.mxu0 %v20
  %358 = vmatprep.subr.mxu0 0.0
  %359 = vmatpush1.msra.mxu0 %v21
  %360 = vmatprep.subr.mxu0 0.0
  %361 = vmatpush1.msra.mxu0 %v22
  %362 = vmatprep.subr.mxu0 0.0
  %363 = vmatpush1.msra.mxu0 %v23
  %364 = vmatprep.subr.mxu0 0.0
  %365 = vmatpush1.msra.mxu0 %v24
  %366 = vmatprep.subr.mxu0 0.0
  %367 = vmatpush1.msra.mxu0 %v25
  %368 = vmatprep.subr.mxu0 0.0
  %369 = vmatpush1.msra.mxu0 %v26
  %370 = vmatprep.subr.mxu0 0.0
  %371 = vmatpush1.msra.mxu0 %v27
  %372 = vmatprep.subr.mxu0 0.0
  %373 = vmatpush1.msra.mxu0 %v28
  %374 = vmatprep.subr.mxu0 0.0
  %375 = vmatpush1.msra.mxu0 %v29
  %376 = vmatprep.subr.mxu0 0.0
  %377 = vmatpush1.msra.mxu0 %v30
  %378 = vmatprep.subr.mxu0 0.0
  %379 = vmatpush1.msra.mxu0 %v31
  %380 = vmatprep.subr.mxu0 0.0
  %381 = vmatpush1.msra.mxu0 %v32
  %382 = vmatprep.subr.mxu0 0.0
  %383 = vmatpush1.msra.mxu0 %v33
  %384 = vmatprep.subr.mxu0 0.0
  %385 = vmatpush1.msra.mxu0 %v34
  %386 = vmatprep.subr.mxu0 0.0
  %387 = vmatpush1.msra.mxu0 %v35
  %388 = vmatprep.subr.mxu0 0.0
  %389 = vmatpush1.msra.mxu0 %v36
  %390 = vmatprep.subr.mxu0 0.0
  %391 = vmatpush1.msra.mxu0 %v37
  %392 = vmatprep.subr.mxu0 0.0
  %393 = vmatpush1.msra.mxu0 %v38
  %394 = vmatprep.subr.mxu0 0.0
  %395 = vmatpush1.msra.mxu0 %v39
  %396 = vmatprep.subr.mxu0 0.0
  %397 = vmatpush1.msra.mxu0 %v40
  %398 = vmatprep.subr.mxu0 0.0
  %399 = vmatpush1.msra.mxu0 %v41
  %400 = vmatprep.subr.mxu0 0.0
  %401 = vmatpush1.msra.mxu0 %v42
  %402 = vmatprep.subr.mxu0 0.0
  %403 = vmatpush1.msra.mxu0 %v43
  %404 = vmatprep.subr.mxu0 0.0
  %405 = vmatpush1.msra.mxu0 %v44
  %406 = vmatprep.subr.mxu0 0.0
  %407 = vmatpush1.msra.mxu0 %v45
  %408 = vmatprep.mubr.f32.mxu0 %v337
  %409 = vmatmul.mubr.f32.gmra.mrb[0].mxu0 %v336
  %v410 = vpop.f32.mrb[0].mxu0
  %v411 = vadd.f32 0.0, %v410
  %v412 = vpop.f32.mrb[0].mxu0
  %413 = vmatprep.mubr.f32.mxu0 %v339
  %414 = vmatmul.mubr.f32.gmra.mrb[0].mxu0 %v338
  %v415 = vpop.f32.mrb[0].mxu0
  %v416 = vadd.f32 0.0, %v415
  %v417 = vpop.f32.mrb[0].mxu0
  %418 = vmatprep.mubr.f32.mxu0 %v341
  %419 = vmatmul.mubr.f32.gmra.mrb[0].mxu0 %v340
  %v420 = vpop.f32.mrb[0].mxu0
  %v421 = vadd.f32 0.0, %v420
  %v422 = vpop.f32.mrb[0].mxu0
  %423 = vmatprep.mubr.f32.mxu0 %v343
  %424 = vmatmul.mubr.f32.gmra.mrb[0].mxu0 %v342
  %v425 = vpop.f32.mrb[0].mxu0
  %v426 = vadd.f32 0.0, %v425
  %v427 = vpop.f32.mrb[0].mxu0
  %428 = vdwg.mxu0
  %v429 = vmax.f32 %v331, %v411
  %v430 = vmax.f32 %v332, %v416
  %v431 = vmax.f32 %v333, %v421
  %v432 = vmax.f32 %v334, %v426
  %v433 = vld [vmem:[%s2] sm:$0x1]
  %v435 = vlaneseq
  %v436 = vshrl.u32 %v435, 7
  %v437 = vsub.s32 0, %v436
  %v438 = vrot.slane %v433, %v437
  %v440 = vadd.f32 %v429, %v438
  %v441 = vadd.f32 %v430, %v438
  %v442 = vadd.f32 %v431, %v438
  %v443 = vadd.f32 %v432, %v438
  %v444 = vmax.f32 %v440, 0.0
  %v445 = vmax.f32 %v441, 0.0
  %v446 = vmax.f32 %v442, 0.0
  %v447 = vmax.f32 %v443, 0.0
  %448 = vst [vmem:[%s3] sm:$0xff] %v444
  %449 = vst [vmem:[%s3 + $0x8] sm:$0xff] %v445
  %450 = vst [vmem:[%s3 + $0x10] sm:$0xff] %v446
  %451 = vst [vmem:[%s3 + $0x18] sm:$0xff] %v447
  // Predicated region
  $region14: #{network_forward.4} parent=0 // pred_check
    _
  $region15: #{network_forward.4} parent=0 // pred_check_branch
    %453 = sbr.rel (0) target = $region17
  $region16: #{network_forward.4} parent=0 // pred_region
    _
  $region17: #{network_forward.4} parent=0 // pred_fallthru
    _
  // Predicated region
  $region18: #{network_forward.4} parent=0 // pred_check
    _
  $region19: #{network_forward.4} parent=0 // pred_check_branch
    %455 = sbr.rel (0) target = $region21
  $region20: #{network_forward.4} parent=0 // pred_region
    _
  $region21: #{network_forward.4} parent=0 // pred_fallthru
    _

// kernel: network_forward.5
$region0: #{network_forward.5}
  #allocation0 [shape = 'u32[]', space=smem, size = 0x4, offset = 0x4, fixed_abs, tag = 'smem constant byte address 0x4 - core index']
  #allocation1 [shape = 'u32[144,128]{1,0:T(1,128)}', space=vmem, size = 0x12000, scoped, tag = 'internal scratch']
  %s0 = inlined_call_operand.vmem [shape: f32[8,256], index: 0, kind: input, shape index: {}]
  %s1 = inlined_call_operand.vmem [shape: f32[256,128], index: 1, kind: input, shape index: {}]
  %s2 = inlined_call_operand.vmem [shape: f32[1,128], index: 2, kind: input, shape index: {}]
  %s3 = inlined_call_operand.vmem [shape: f32[128,128], index: 3, kind: input, shape index: {}]
  %s4 = inlined_call_operand.vmem [shape: f32[1,128], index: 4, kind: input, shape index: {}]
  %s5 = inlined_call_operand.vmem [shape: f32[128,128], index: 5, kind: input, shape index: {}]
  %s6 = inlined_call_operand.vmem [shape: f32[1,128], index: 6, kind: input, shape index: {}]
  %s7 = inlined_call_operand.vmem [shape: f32[8,128], index: 7, kind: output, shape index: {}]
  %s8 = sld [smem:[#allocation0]]
  $region38: #{network_forward.5} parent=0
    _
  %s10 = ssub.s32 1, %s8
  %s11 = scalar_select 0, %s10, %s8
  // Predicated region
  $region2: #{network_forward.5} parent=0 // pred_check
    _
  $region3: #{network_forward.5} parent=0 // pred_check_branch
    %13 = sbr.rel (0) target = $region5
  $region4: #{network_forward.5} parent=0 // pred_region
    _
  $region5: #{network_forward.5} parent=0 // pred_fallthru
    _
  // Predicated region
  $region6: #{network_forward.5} parent=0 // pred_check
    _
  $region7: #{network_forward.5} parent=0 // pred_check_branch
    %15 = sbr.rel (0) target = $region9
  $region8: #{network_forward.5} parent=0 // pred_region
    _
  $region9: #{network_forward.5} parent=0 // pred_fallthru
    _
  // Predicated region
  $region10: #{network_forward.5} parent=0 // pred_check
    _
  $region11: #{network_forward.5} parent=0 // pred_check_branch
    %17 = sbr.rel (0) target = $region13
  $region12: #{network_forward.5} parent=0 // pred_region
    _
  $region13: #{network_forward.5} parent=0 // pred_fallthru
    _
  // Predicated region
  $region14: #{network_forward.5} parent=0 // pred_check
    _
  $region15: #{network_forward.5} parent=0 // pred_check_branch
    %19 = sbr.rel (0) target = $region17
  $region16: #{network_forward.5} parent=0 // pred_region
    _
  $region17: #{network_forward.5} parent=0 // pred_fallthru
    _
  // Predicated region
  $region18: #{network_forward.5} parent=0 // pred_check
    _
  $region19: #{network_forward.5} parent=0 // pred_check_branch
    %21 = sbr.rel (0) target = $region21
  $region20: #{network_forward.5} parent=0 // pred_region
    _
  $region21: #{network_forward.5} parent=0 // pred_fallthru
    _
  // Predicated region
  $region22: #{network_forward.5} parent=0 // pred_check
    _
  $region23: #{network_forward.5} parent=0 // pred_check_branch
    %23 = sbr.rel (0) target = $region25
  $region24: #{network_forward.5} parent=0 // pred_region
    _
  $region25: #{network_forward.5} parent=0 // pred_fallthru
    _
  // Predicated region
  $region26: #{network_forward.5} parent=0 // pred_check
    _
  $region27: #{network_forward.5} parent=0 // pred_check_branch
    %25 = sbr.rel (0) target = $region29
  $region28: #{network_forward.5} parent=0 // pred_region
    _
  $region29: #{network_forward.5} parent=0 // pred_fallthru
    _
  %v26 = vld [vmem:[%s0] sm:$0xff]
  %v27 = vld [vmem:[%s0 + $0x8] sm:$0xff]
  %v28 = vld [vmem:[%s1] sm:$0xff]
  %v29 = vld [vmem:[%s1 + $0x8] sm:$0xff]
  %v30 = vld [vmem:[%s1 + $0x10] sm:$0xff]
  %v31 = vld [vmem:[%s1 + $0x18] sm:$0xff]
  %v32 = vld [vmem:[%s1 + $0x20] sm:$0xff]
  %v33 = vld [vmem:[%s1 + $0x28] sm:$0xff]
  %v34 = vld [vmem:[%s1 + $0x30] sm:$0xff]
  %v35 = vld [vmem:[%s1 + $0x38] sm:$0xff]
  %v36 = vld [vmem:[%s1 + $0x40] sm:$0xff]
  %v37 = vld [vmem:[%s1 + $0x48] sm:$0xff]
  %v38 = vld [vmem:[%s1 + $0x50] sm:$0xff]
  %v39 = vld [vmem:[%s1 + $0x58] sm:$0xff]
  %v40 = vld [vmem:[%s1 + $0x60] sm:$0xff]
  %v41 = vld [vmem:[%s1 + $0x68] sm:$0xff]
  %v42 = vld [vmem:[%s1 + $0x70] sm:$0xff]
  %v43 = vld [vmem:[%s1 + $0x78] sm:$0xff]
  %v44 = vld [vmem:[%s1 + $0x80] sm:$0xff]
  %v45 = vld [vmem:[%s1 + $0x88] sm:$0xff]
  %v46 = vld [vmem:[%s1 + $0x90] sm:$0xff]
  %v47 = vld [vmem:[%s1 + $0x98] sm:$0xff]
  %v48 = vld [vmem:[%s1 + $0xa0] sm:$0xff]
  %v49 = vld [vmem:[%s1 + $0xa8] sm:$0xff]
  %v50 = vld [vmem:[%s1 + $0xb0] sm:$0xff]
  %v51 = vld [vmem:[%s1 + $0xb8] sm:$0xff]
  %v52 = vld [vmem:[%s1 + $0xc0] sm:$0xff]
  %v53 = vld [vmem:[%s1 + $0xc8] sm:$0xff]
  %v54 = vld [vmem:[%s1 + $0xd0] sm:$0xff]
  %v55 = vld [vmem:[%s1 + $0xd8] sm:$0xff]
  %v56 = vld [vmem:[%s1 + $0xe0] sm:$0xff]
  %v57 = vld [vmem:[%s1 + $0xe8] sm:$0xff]
  %v58 = vld [vmem:[%s1 + $0xf0] sm:$0xff]
  %v59 = vld [vmem:[%s1 + $0xf8] sm:$0xff]
  %v60 = vld [vmem:[%s2] sm:$0x1]
  %v62 = vlaneseq
  %v63 = vshrl.u32 %v62, 7
  %v64 = vsub.s32 0, %v63
  %v65 = vrot.slane %v60, %v64
  %67 = vmatprep.subr.mxu0 0.0
  %68 = vmatpush1.msra.mxu0 %v28
  %69 = vmatprep.subr.mxu0 0.0
  %70 = vmatpush1.msra.mxu0 %v29
  %71 = vmatprep.subr.mxu0 0.0
  %72 = vmatpush1.msra.mxu0 %v30
  %73 = vmatprep.subr.mxu0 0.0
  %74 = vmatpush1.msra.mxu0 %v31
  %75 = vmatprep.subr.mxu0 0.0
  %76 = vmatpush1.msra.mxu0 %v32
  %77 = vmatprep.subr.mxu0 0.0
  %78 = vmatpush1.msra.mxu0 %v33
  %79 = vmatprep.subr.mxu0 0.0
  %80 = vmatpush1.msra.mxu0 %v34
  %81 = vmatprep.subr.mxu0 0.0
  %82 = vmatpush1.msra.mxu0 %v35
  %83 = vmatprep.subr.mxu0 0.0
  %84 = vmatpush1.msra.mxu0 %v36
  %85 = vmatprep.subr.mxu0 0.0
  %86 = vmatpush1.msra.mxu0 %v37
  %87 = vmatprep.subr.mxu0 0.0
  %88 = vmatpush1.msra.mxu0 %v38
  %89 = vmatprep.subr.mxu0 0.0
  %90 = vmatpush1.msra.mxu0 %v39
  %91 = vmatprep.subr.mxu0 0.0
  %92 = vmatpush1.msra.mxu0 %v40
  %93 = vmatprep.subr.mxu0 0.0
  %94 = vmatpush1.msra.mxu0 %v41
  %95 = vmatprep.subr.mxu0 0.0
  %96 = vmatpush1.msra.mxu0 %v42
  %97 = vmatprep.subr.mxu0 0.0
  %98 = vmatpush1.msra.mxu0 %v43
  %99 = vmatprep.subr.mxu0 0.0
  %100 = vmatpush1.msra.mxu0 %v44
  %101 = vmatprep.subr.mxu0 0.0
  %102 = vmatpush1.msra.mxu0 %v45
  %103 = vmatprep.subr.mxu0 0.0
  %104 = vmatpush1.msra.mxu0 %v46
  %105 = vmatprep.subr.mxu0 0.0
  %106 = vmatpush1.msra.mxu0 %v47
  %107 = vmatprep.subr.mxu0 0.0
  %108 = vmatpush1.msra.mxu0 %v48
  %109 = vmatprep.subr.mxu0 0.0
  %110 = vmatpush1.msra.mxu0 %v49
  %111 = vmatprep.subr.mxu0 0.0
  %112 = vmatpush1.msra.mxu0 %v50
  %113 = vmatprep.subr.mxu0 0.0
  %114 = vmatpush1.msra.mxu0 %v51
  %115 = vmatprep.subr.mxu0 0.0
  %116 = vmatpush1.msra.mxu0 %v52
  %117 = vmatprep.subr.mxu0 0.0
  %118 = vmatpush1.msra.mxu0 %v53
  %119 = vmatprep.subr.mxu0 0.0
  %120 = vmatpush1.msra.mxu0 %v54
  %121 = vmatprep.subr.mxu0 0.0
  %122 = vmatpush1.msra.mxu0 %v55
  %123 = vmatprep.subr.mxu0 0.0
  %124 = vmatpush1.msra.mxu0 %v56
  %125 = vmatprep.subr.mxu0 0.0
  %126 = vmatpush1.msra.mxu0 %v57
  %127 = vmatprep.subr.mxu0 0.0
  %128 = vmatpush1.msra.mxu0 %v58
  %129 = vmatprep.subr.mxu0 0.0
  %130 = vmatpush1.msra.mxu0 %v59
  %131 = vmatprep.mubr.f32.mxu0 %v27
  %132 = vmatmul.mubr.f32.gmra.mrb[0].mxu0 %v26
  %v133 = vpop.f32.mrb[0].mxu0
  %v134 = vadd.f32 %v65, %v133
  %v135 = vpop.f32.mrb[0].mxu0
  %136 = vdwg.mxu0
  %v137 = vmax.f32 %v134, 0.0
  %v138 = vld [vmem:[%s3] sm:$0xff]
  %v139 = vld [vmem:[%s3 + $0x8] sm:$0xff]
  %v140 = vld [vmem:[%s3 + $0x10] sm:$0xff]
  %v141 = vld [vmem:[%s3 + $0x18] sm:$0xff]
  %v142 = vld [vmem:[%s3 + $0x20] sm:$0xff]
  %v143 = vld [vmem:[%s3 + $0x28] sm:$0xff]
  %v144 = vld [vmem:[%s3 + $0x30] sm:$0xff]
  %v145 = vld [vmem:[%s3 + $0x38] sm:$0xff]
  %v146 = vld [vmem:[%s3 + $0x40] sm:$0xff]
  %v147 = vld [vmem:[%s3 + $0x48] sm:$0xff]
  %v148 = vld [vmem:[%s3 + $0x50] sm:$0xff]
  %v149 = vld [vmem:[%s3 + $0x58] sm:$0xff]
  %v150 = vld [vmem:[%s3 + $0x60] sm:$0xff]
  %v151 = vld [vmem:[%s3 + $0x68] sm:$0xff]
  %v152 = vld [vmem:[%s3 + $0x70] sm:$0xff]
  %v153 = vld [vmem:[%s3 + $0x78] sm:$0xff]
  %v154 = vld [vmem:[%s4] sm:$0x1]
  %v156 = vlaneseq
  %v157 = vshrl.u32 %v156, 7
  %v158 = vsub.s32 0, %v157
  %v159 = vrot.slane %v154, %v158
  %161 = vmatprep.subr.mxu0 0.0
  %162 = vmatpush1.msra.mxu0 %v138
  %163 = vmatprep.subr.mxu0 0.0
  %164 = vmatpush1.msra.mxu0 %v139
  %165 = vmatprep.subr.mxu0 0.0
  %166 = vmatpush1.msra.mxu0 %v140
  %167 = vmatprep.subr.mxu0 0.0
  %168 = vmatpush1.msra.mxu0 %v141
  %169 = vmatprep.subr.mxu0 0.0
  %170 = vmatpush1.msra.mxu0 %v142
  %171 = vmatprep.subr.mxu0 0.0
  %172 = vmatpush1.msra.mxu0 %v143
  %173 = vmatprep.subr.mxu0 0.0
  %174 = vmatpush1.msra.mxu0 %v144
  %175 = vmatprep.subr.mxu0 0.0
  %176 = vmatpush1.msra.mxu0 %v145
  %177 = vmatprep.subr.mxu0 0.0
  %178 = vmatpush1.msra.mxu0 %v146
  %179 = vmatprep.subr.mxu0 0.0
  %180 = vmatpush1.msra.mxu0 %v147
  %181 = vmatprep.subr.mxu0 0.0
  %182 = vmatpush1.msra.mxu0 %v148
  %183 = vmatprep.subr.mxu0 0.0
  %184 = vmatpush1.msra.mxu0 %v149
  %185 = vmatprep.subr.mxu0 0.0
  %186 = vmatpush1.msra.mxu0 %v150
  %187 = vmatprep.subr.mxu0 0.0
  %188 = vmatpush1.msra.mxu0 %v151
  %189 = vmatprep.subr.mxu0 0.0
  %190 = vmatpush1.msra.mxu0 %v152
  %191 = vmatprep.subr.mxu0 0.0
  %192 = vmatpush1.msra.mxu0 %v153
  %193 = vmatprep.subr.mxu0 0.0
  %194 = vmatpush1.msra.mxu0 0.0
  %195 = vmatprep.subr.mxu0 0.0
  %196 = vmatpush1.msra.mxu0 0.0
  %197 = vmatprep.subr.mxu0 0.0
  %198 = vmatpush1.msra.mxu0 0.0
  %199 = vmatprep.subr.mxu0 0.0
  %200 = vmatpush1.msra.mxu0 0.0
  %201 = vmatprep.subr.mxu0 0.0
  %202 = vmatpush1.msra.mxu0 0.0
  %203 = vmatprep.subr.mxu0 0.0
  %204 = vmatpush1.msra.mxu0 0.0
  %205 = vmatprep.subr.mxu0 0.0
  %206 = vmatpush1.msra.mxu0 0.0
  %207 = vmatprep.subr.mxu0 0.0
  %208 = vmatpush1.msra.mxu0 0.0
  %209 = vmatprep.subr.mxu0 0.0
  %210 = vmatpush1.msra.mxu0 0.0
  %211 = vmatprep.subr.mxu0 0.0
  %212 = vmatpush1.msra.mxu0 0.0
  %213 = vmatprep.subr.mxu0 0.0
  %214 = vmatpush1.msra.mxu0 0.0
  %215 = vmatprep.subr.mxu0 0.0
  %216 = vmatpush1.msra.mxu0 0.0
  %217 = vmatprep.subr.mxu0 0.0
  %218 = vmatpush1.msra.mxu0 0.0
  %219 = vmatprep.subr.mxu0 0.0
  %220 = vmatpush1.msra.mxu0 0.0
  %221 = vmatprep.subr.mxu0 0.0
  %222 = vmatpush1.msra.mxu0 0.0
  %223 = vmatprep.subr.mxu0 0.0
  %224 = vmatpush1.msra.mxu0 0.0
  %225 = vmatprep.mubr.f32.mxu0 0.0
  %226 = vmatmul.mubr.f32.gmra.mrb[0].mxu0 %v137
  %v227 = vpop.f32.mrb[0].mxu0
  %v228 = vadd.f32 %v159, %v227
  %v229 = vpop.f32.mrb[0].mxu0
  %230 = vdwg.mxu0
  %v231 = vmax.f32 %v228, 0.0
  %v232 = vld [vmem:[%s5] sm:$0xff]
  %v233 = vld [vmem:[%s5 + $0x8] sm:$0xff]
  %v234 = vld [vmem:[%s5 + $0x10] sm:$0xff]
  %v235 = vld [vmem:[%s5 + $0x18] sm:$0xff]
  %v236 = vld [vmem:[%s5 + $0x20] sm:$0xff]
  %v237 = vld [vmem:[%s5 + $0x28] sm:$0xff]
  %v238 = vld [vmem:[%s5 + $0x30] sm:$0xff]
  %v239 = vld [vmem:[%s5 + $0x38] sm:$0xff]
  %v240 = vld [vmem:[%s5 + $0x40] sm:$0xff]
  %v241 = vld [vmem:[%s5 + $0x48] sm:$0xff]
  %v242 = vld [vmem:[%s5 + $0x50] sm:$0xff]
  %v243 = vld [vmem:[%s5 + $0x58] sm:$0xff]
  %v244 = vld [vmem:[%s5 + $0x60] sm:$0xff]
  %v245 = vld [vmem:[%s5 + $0x68] sm:$0xff]
  %v246 = vld [vmem:[%s5 + $0x70] sm:$0xff]
  %v247 = vld [vmem:[%s5 + $0x78] sm:$0xff]
  %v248 = vld [vmem:[%s6] sm:$0x1]
  %v250 = vlaneseq
  %v251 = vshrl.u32 %v250, 7
  %v252 = vsub.s32 0, %v251
  %v253 = vrot.slane %v248, %v252
  %255 = vmatprep.subr.mxu0 0.0
  %256 = vmatpush1.msra.mxu0 %v232
  %257 = vmatprep.subr.mxu0 0.0
  %258 = vmatpush1.msra.mxu0 %v233
  %259 = vmatprep.subr.mxu0 0.0
  %260 = vmatpush1.msra.mxu0 %v234
  %261 = vmatprep.subr.mxu0 0.0
  %262 = vmatpush1.msra.mxu0 %v235
  %263 = vmatprep.subr.mxu0 0.0
  %264 = vmatpush1.msra.mxu0 %v236
  %265 = vmatprep.subr.mxu0 0.0
  %266 = vmatpush1.msra.mxu0 %v237
  %267 = vmatprep.subr.mxu0 0.0
  %268 = vmatpush1.msra.mxu0 %v238
  %269 = vmatprep.subr.mxu0 0.0
  %270 = vmatpush1.msra.mxu0 %v239
  %271 = vmatprep.subr.mxu0 0.0
  %272 = vmatpush1.msra.mxu0 %v240
  %273 = vmatprep.subr.mxu0 0.0
  %274 = vmatpush1.msra.mxu0 %v241
  %275 = vmatprep.subr.mxu0 0.0
  %276 = vmatpush1.msra.mxu0 %v242
  %277 = vmatprep.subr.mxu0 0.0
  %278 = vmatpush1.msra.mxu0 %v243
  %279 = vmatprep.subr.mxu0 0.0
  %280 = vmatpush1.msra.mxu0 %v244
  %281 = vmatprep.subr.mxu0 0.0
  %282 = vmatpush1.msra.mxu0 %v245
  %283 = vmatprep.subr.mxu0 0.0
  %284 = vmatpush1.msra.mxu0 %v246
  %285 = vmatprep.subr.mxu0 0.0
  %286 = vmatpush1.msra.mxu0 %v247
  %287 = vmatprep.subr.mxu0 0.0
  %288 = vmatpush1.msra.mxu0 0.0
  %289 = vmatprep.subr.mxu0 0.0
  %290 = vmatpush1.msra.mxu0 0.0
  %291 = vmatprep.subr.mxu0 0.0
  %292 = vmatpush1.msra.mxu0 0.0
  %293 = vmatprep.subr.mxu0 0.0
  %294 = vmatpush1.msra.mxu0 0.0
  %295 = vmatprep.subr.mxu0 0.0
  %296 = vmatpush1.msra.mxu0 0.0
  %297 = vmatprep.subr.mxu0 0.0
  %298 = vmatpush1.msra.mxu0 0.0
  %299 = vmatprep.subr.mxu0 0.0
  %300 = vmatpush1.msra.mxu0 0.0
  %301 = vmatprep.subr.mxu0 0.0
  %302 = vmatpush1.msra.mxu0 0.0
  %303 = vmatprep.subr.mxu0 0.0
  %304 = vmatpush1.msra.mxu0 0.0
  %305 = vmatprep.subr.mxu0 0.0
  %306 = vmatpush1.msra.mxu0 0.0
  %307 = vmatprep.subr.mxu0 0.0
  %308 = vmatpush1.msra.mxu0 0.0
  %309 = vmatprep.subr.mxu0 0.0
  %310 = vmatpush1.msra.mxu0 0.0
  %311 = vmatprep.subr.mxu0 0.0
  %312 = vmatpush1.msra.mxu0 0.0
  %313 = vmatprep.subr.mxu0 0.0
  %314 = vmatpush1.msra.mxu0 0.0
  %315 = vmatprep.subr.mxu0 0.0
  %316 = vmatpush1.msra.mxu0 0.0
  %317 = vmatprep.subr.mxu0 0.0
  %318 = vmatpush1.msra.mxu0 0.0
  %319 = vmatprep.mubr.f32.mxu0 0.0
  %320 = vmatmul.mubr.f32.gmra.mrb[0].mxu0 %v231
  %v321 = vpop.f32.mrb[0].mxu0
  %v322 = vadd.f32 %v253, %v321
  %v323 = vpop.f32.mrb[0].mxu0
  %324 = vdwg.mxu0
  %325 = vst [vmem:[%s7] sm:$0xff] %v322
  // Predicated region
  $region30: #{network_forward.5} parent=0 // pred_check
    _
  $region31: #{network_forward.5} parent=0 // pred_check_branch
    %327 = sbr.rel (0) target = $region33
  $region32: #{network_forward.5} parent=0 // pred_region
    _
  $region33: #{network_forward.5} parent=0 // pred_fallthru
    _
  // Predicated region
  $region34: #{network_forward.5} parent=0 // pred_check
    _
  $region35: #{network_forward.5} parent=0 // pred_check_branch
    %329 = sbr.rel (0) target = $region37
  $region36: #{network_forward.5} parent=0 // pred_region
    _
  $region37: #{network_forward.5} parent=0 // pred_fallthru
    _

</llo_original>
